<compile_context>
chip_gen: v7x
topology: tpu7x:2x2x1
jax: 0.10.0
libtpu: 0.0.40
codegen_flags: <defaults>
</compile_context>

<pallas_src>
import jax
import jax.numpy as jnp
from jax import lax
from jax.experimental import pallas as pl
from jax.experimental.pallas import tpu as pltpu

EPS = 1e-12  # F.normalize default eps


# --------------------------------------------------------------------------- #
# Kernel
# --------------------------------------------------------------------------- #
def _make_netvlad_kernel(b_tile, matmul_dtype):
    def kernel(x_ref, w_ref, c_ref, out_ref, acc_ref, asum_ref):
        # x_ref   : (b_tile, D, s_chunk) f32   channel-major descriptors
        # w_ref   : (K, D) f32                 1x1 conv weight
        # c_ref   : (K, D) f32                 cluster centroids
        # out_ref : (b_tile, K, D) f32         fully-normalized VLAD block
        # acc_ref : (b_tile, K, D) f32 scratch sum_s a_r * x over all S-chunks
        # asum_ref: (b_tile, K, 1) f32 scratch sum_s a
        s_idx = pl.program_id(1)
        n_s = pl.num_programs(1)

        @pl.when(s_idx == 0)
        def _():
            acc_ref[...] = jnp.zeros_like(acc_ref)
            asum_ref[...] = jnp.zeros_like(asum_ref)

        w_mm = w_ref[...].astype(matmul_dtype)            # hoisted once per step

        for b in range(b_tile):                           # static unroll (small)
            x_b = x_ref[b]                                # (D, s_chunk) f32
            # Descriptor-wise L2 norm folded into the assignment instead of
            # materializing xn: rsqrt(max(ssq, eps^2)) == 1/max(||x_s||, eps).
            ssq = jnp.sum(x_b * x_b, axis=0, keepdims=True)        # (1, s_chunk)
            r = lax.rsqrt(jnp.maximum(ssq, EPS * EPS))             # (1, s_chunk)

            x_mm = x_b.astype(matmul_dtype)
            logits = lax.dot_general(
                w_mm, x_mm,
                dimension_numbers=(((1,), (0,)), ((), ())),        # contract D
                preferred_element_type=jnp.float32)                # (K, s_chunk)
            logits = logits * r                  # == logits of normalized x

            # softmax over clusters (axis 0)
            m = jnp.max(logits, axis=0, keepdims=True)             # (1, s_chunk)
            e = jnp.exp(logits - m)                                # (K, s_chunk)
            inv_den = 1.0 / jnp.sum(e, axis=0, keepdims=True)      # (1, s_chunk)
            a = e * inv_den                                        # soft assign
            a_r = a * r                          # fold descriptor norm into a

            # Partial aggregation for this S-chunk: agg[k,d] = sum_s a_r * x
            agg = lax.dot_general(
                a_r.astype(matmul_dtype), x_mm,
                dimension_numbers=(((1,), (1,)), ((), ())),        # contract S
                preferred_element_type=jnp.float32)                # (K, D)
            acc_ref[b] += agg
            asum_ref[b] += jnp.sum(a, axis=1, keepdims=True)       # (K, 1)

        @pl.when(s_idx == n_s - 1)
        def _():
            # vlad[b,k,d] = sum_s a * (xn - c) = acc - c * a_sum
            vlad = acc_ref[...] - c_ref[...][None, :, :] * asum_ref[...]
            # Fused intra-cluster + global L2 normalization; the global norm is
            # derived from the per-cluster norms (K-length reduce only).
            vn2 = jnp.sum(vlad * vlad, axis=2, keepdims=True)      # (B, K, 1)
            intra = lax.rsqrt(jnp.maximum(vn2, EPS * EPS))         # 1/max(||v_k||,eps)
            gsq = jnp.sum(vn2 * intra * intra, axis=1, keepdims=True)  # (B,1,1)
            gscale = lax.rsqrt(jnp.maximum(gsq, EPS * EPS))
            out_ref[...] = vlad * (intra * gscale)                 # single fused scale

    return kernel


# --------------------------------------------------------------------------- #
# Generation-aware sizing (shared accounting for budget AND vmem_limit_bytes)
# --------------------------------------------------------------------------- #
def _vmem_capacity_bytes():
    try:
        cap = getattr(pltpu.get_tpu_info(), "vmem_capacity_bytes", None)
        if cap:
            return int(cap)
    except Exception:
        pass
    return 64 * 1024 * 1024  # conservative v7x per-TC fallback


def _per_step_vmem_bytes(bt, d, s_chunk, k, mm_itemsize):
    f32 = 4
    x_blk = 2 * bt * d * s_chunk * f32            # double-buffered input block
    w_c_blk = 2 * 2 * k * d * f32                 # w + centroids, double-buffered
    out_blk = 2 * bt * k * d * f32                # double-buffered output block
    scratch = bt * k * d * f32 + bt * k * 128 * f32   # acc + lane-padded a_sum
    live = (4 * k * s_chunk * f32                 # logits / e / a / a_r
            + d * s_chunk * (f32 + mm_itemsize)   # x_b load + matmul-dtype copy
            + k * s_chunk * mm_itemsize           # a_r matmul-dtype copy
            + 2 * k * d * f32)                    # agg partial + epilogue temps
    return x_blk + w_c_blk + out_blk + scratch + live


def _pick_s_chunk(s_total, target=512):
    """Largest lane-dense (multiple-of-128) divisor of S up to `target`,
    else the full S (block last dim must be a multiple of 128 or the full dim)."""
    if s_total <= target:
        return s_total
    best = 0
    c = 128
    while c <= target:
        if s_total % c == 0:
            best = c
        c += 128
    # TODO(synk): for S with no multiple-of-128 divisor (e.g. S~1000 feature
    # maps), pad S to a multiple of 128 in the wrapper and mask padded columns'
    # soft-assignments to zero inside the kernel instead of falling back.
    return best if best > 0 else s_total


def _pick_b_tile(n, d, s_chunk, k, budget, mm_itemsize, max_tile=8):
    cap = min(n, max_tile)
    if n >= 4:
        # Keep >= 4 batch grid steps so v7x megacore gets >= 2 steps per
        # TensorCore and the double-buffered pipeline reaches steady state.
        cap = min(cap, max(1, n // 4))
    for bt in range(cap, 0, -1):
        if n % bt == 0 and _per_step_vmem_bytes(bt, d, s_chunk, k, mm_itemsize) <= budget:
            return bt
    return 1


# --------------------------------------------------------------------------- #
# Wrapper
# --------------------------------------------------------------------------- #
def netvlad_forward(x_nchw, conv_weight, centroids, *, b_tile=None, s_chunk=None,
                    matmul_dtype=jnp.bfloat16):
    """x_nchw: (N, D, H, W); conv_weight: (K, D, 1, 1); centroids: (K, D).
    Returns (N, K*D) float32.  matmul_dtype=jnp.bfloat16 (default, fast MXU
    path, f32 accumulation) or jnp.float32 (exact path)."""
    N, D, H, W = x_nchw.shape
    K = centroids.shape[0]
    S = H * W

    # Channel-major (N, D, S): a free contiguous reshape of NCHW — no HBM
    # transpose pass before the kernel.
    x = x_nchw.reshape(N, D, S).astype(jnp.float32)
    w2d = conv_weight.reshape(K, D).astype(jnp.float32)
    c2d = centroids.astype(jnp.float32)

    mm_itemsize = jnp.dtype(matmul_dtype).itemsize
    vmem_cap = _vmem_capacity_bytes()
    budget = int(0.4 * vmem_cap)      # per-step accounted working-set budget

    if s_chunk is None:
        s_chunk = _pick_s_chunk(S)
    assert s_chunk == S or (S % s_chunk == 0 and s_chunk % 128 == 0), \
        "s_chunk must equal S or be a multiple of 128 that divides S"
    if b_tile is None:
        b_tile = _pick_b_tile(N, D, s_chunk, K, budget, mm_itemsize)
    assert N % b_tile == 0, "b_tile must divide the batch size N (no dropped images)"

    est = _per_step_vmem_bytes(b_tile, D, s_chunk, K, mm_itemsize)
    vmem_limit = min(int(0.9 * vmem_cap), max(32 << 20, est + est // 2))

    kernel = _make_netvlad_kernel(b_tile, matmul_dtype)

    out = pl.pallas_call(
        kernel,
        out_shape=jax.ShapeDtypeStruct((N, K, D), jnp.float32),
        grid_spec=pltpu.PrefetchScalarGridSpec(
            num_scalar_prefetch=0,
            grid=(N // b_tile, S // s_chunk),        # reduction (S) axis last
            in_specs=[
                pl.BlockSpec((b_tile, D, s_chunk), lambda b, s: (b, 0, s)),
                pl.BlockSpec((K, D), lambda b, s: (0, 0)),
                pl.BlockSpec((K, D), lambda b, s: (0, 0)),
            ],
            out_specs=pl.BlockSpec((b_tile, K, D), lambda b, s: (b, 0, 0)),
            scratch_shapes=[
                pltpu.VMEM((b_tile, K, D), jnp.float32),   # agg accumulator
                pltpu.VMEM((b_tile, K, 1), jnp.float32),   # a_sum accumulator
            ],
        ),
        compiler_params=pltpu.CompilerParams(
            dimension_semantics=("parallel", "arbitrary"),
            vmem_limit_bytes=int(vmem_limit),
        ),
    )(x, w2d, c2d)

    # Contiguous minor-dim merge — effectively free at the XLA level.
    return out.reshape(N, K * D)


# --------------------------------------------------------------------------- #
# Pure-JAX reference (mirrors the PyTorch forward exactly)
# --------------------------------------------------------------------------- #
def netvlad_reference(x_nchw, conv_weight, centroids):
    N, D, H, W = x_nchw.shape
    K = centroids.shape[0]
    x = x_nchw.astype(jnp.float32)
    norm = jnp.sqrt(jnp.sum(x * x, axis=1, keepdims=True))
    xn = x / jnp.maximum(norm, EPS)                             # (N, D, H, W)
    x_flat = xn.reshape(N, D, -1)                               # (N, D, S)
    w = conv_weight.reshape(K, D).astype(jnp.float32)
    logits = jnp.einsum("kd,nds->nks", w, x_flat,
                        precision=lax.Precision.HIGHEST)
    a = jax.nn.softmax(logits, axis=1)                          # (N, K, S)
    vlad = jnp.einsum("nks,nds->nkd", a, x_flat,
                      precision=lax.Precision.HIGHEST) \
        - centroids.astype(jnp.float32)[None, :, :] * jnp.sum(a, axis=-1)[:, :, None]
    vn = jnp.sqrt(jnp.sum(vlad * vlad, axis=2, keepdims=True))
    vlad = vlad / jnp.maximum(vn, EPS)
    vlad = vlad.reshape(N, -1)
    gn = jnp.sqrt(jnp.sum(vlad * vlad, axis=1, keepdims=True))
    return vlad / jnp.maximum(gn, EPS)


if __name__ == "__main__":
    # Module-default cluster/descriptor sizes (clusters_num=64, dim=128),
    # small spatial grid; N=10 -> b_tile=2 -> 5 "parallel" batch grid steps.
    N, D, H, W = 10, 128, 8, 8
    K = 64

    key = jax.random.PRNGKey(0)
    kx, kw, kc = jax.random.split(key, 3)

    x = jax.random.normal(kx, (N, D, H, W), dtype=jnp.float32)
    conv_weight = 0.1 * jax.random.normal(kw, (K, D, 1, 1), dtype=jnp.float32)
    centroids = jax.random.uniform(kc, (K, D), dtype=jnp.float32)

    ref = jax.block_until_ready(netvlad_reference(x, conv_weight, centroids))

    # Exact (f32 MXU) path: matches the PyTorch forward to tight tolerance.
    out_f32 = jax.block_until_ready(
        netvlad_forward(x, conv_weight, centroids, matmul_dtype=jnp.float32))
    assert out_f32.shape == (N, K * D)
    err_f32 = float(jnp.max(jnp.abs(out_f32 - ref)))
    assert jnp.allclose(out_f32, ref, rtol=2e-5, atol=2e-5), err_f32

    # Default fast path: bf16 MXU operands, f32 accumulation (bf16-appropriate
    # tolerance, per perf review).
    out_bf16 = jax.block_until_ready(netvlad_forward(x, conv_weight, centroids))
    assert out_bf16.shape == (N, K * D)
    err_bf16 = float(jnp.max(jnp.abs(out_bf16 - ref)))
    assert jnp.allclose(out_bf16, ref, rtol=2e-3, atol=2e-3), err_bf16

    print("KERNEL_OK")
</pallas_src>

<mosaic_0001>
module attributes {stable_mosaic.version = 11 : i64} {
  func.func @kernel(%arg0: i32, %arg1: i32, %arg2: memref<2x128x64xf32, #tpu.memory_space<vmem>>, %arg3: memref<64x128xf32, #tpu.memory_space<vmem>>, %arg4: memref<64x128xf32, #tpu.memory_space<vmem>>, %arg5: memref<2x64x128xf32, #tpu.memory_space<vmem>>, %arg6: memref<2x64x128xf32, #tpu.memory_space<vmem>>, %arg7: memref<2x64x1xf32, #tpu.memory_space<vmem>>) attributes {dimension_semantics = [#tpu.dimension_semantics<parallel>, #tpu.dimension_semantics<arbitrary>], iteration_bounds = array<i64: 5, 1>, scalar_prefetch = 0 : i64, scratch_operands = 2 : i64, tpu.core_type = #tpu.core_type<tc>, window_params = [{transform_indices = @transform_0, window_bounds = array<i64: 2, 128, 64>}, {pipeline_mode = #tpu.pipeline_mode<synchronous>, transform_indices = @transform_1, window_bounds = array<i64: 64, 128>}, {pipeline_mode = #tpu.pipeline_mode<synchronous>, transform_indices = @transform_2, window_bounds = array<i64: 64, 128>}, {transform_indices = @transform_3, window_bounds = array<i64: 2, 64, 128>}]} {
    %c0_i32 = arith.constant 0 : i32
    %0 = arith.cmpi eq, %arg1, %c0_i32 : i32
    %1 = arith.extui %0 : i1 to i32
    %c0_i32_0 = arith.constant 0 : i32
    %2 = arith.cmpi ne, %1, %c0_i32_0 : i32
    scf.if %2 {
      %cst_48 = arith.constant 0.000000e+00 : f32
      %85 = vector.broadcast %cst_48 : f32 to vector<2x64x128xf32>
      %c0_49 = arith.constant 0 : index
      %c0_50 = arith.constant 0 : index
      %c0_51 = arith.constant 0 : index
      %86 = vector.load %arg6[%c0_49, %c0_50, %c0_51] : memref<2x64x128xf32, #tpu.memory_space<vmem>>, vector<2x64x128xf32>
      tpu.vector_store %arg6[%c0_49, %c0_50, %c0_51], %85 {strides = array<i32>} : memref<2x64x128xf32, #tpu.memory_space<vmem>>, vector<2x64x128xf32>,
      %cst_52 = arith.constant 0.000000e+00 : f32
      %87 = vector.broadcast %cst_52 : f32 to vector<2x64x1xf32>
      %c0_53 = arith.constant 0 : index
      %c0_54 = arith.constant 0 : index
      %c0_55 = arith.constant 0 : index
      %88 = vector.load %arg7[%c0_53, %c0_54, %c0_55] : memref<2x64x1xf32, #tpu.memory_space<vmem>>, vector<2x64x1xf32>
      tpu.vector_store %arg7[%c0_53, %c0_54, %c0_55], %87 {strides = array<i32>} : memref<2x64x1xf32, #tpu.memory_space<vmem>>, vector<2x64x1xf32>,
    } else {
    }
    %c0 = arith.constant 0 : index
    %c0_1 = arith.constant 0 : index
    %3 = vector.load %arg3[%c0, %c0_1] : memref<64x128xf32, #tpu.memory_space<vmem>>, vector<64x128xf32>
    %c0_2 = arith.constant 0 : index
    %c0_3 = arith.constant 0 : index
    %c0_4 = arith.constant 0 : index
    %4 = vector.load %arg2[%c0_2, %c0_3, %c0_4] : memref<2x128x64xf32, #tpu.memory_space<vmem>>, vector<1x128x64xf32>
    %5 = vector.shape_cast %4 : vector<1x128x64xf32> to vector<128x64xf32>
    %6 = arith.mulf %5, %5 : vector<128x64xf32>
    %cst = arith.constant dense<0.000000e+00> : vector<64xf32>
    %7 = vector.multi_reduction <add>, %6, %cst [0] : vector<128x64xf32> to vector<64xf32>
    %8 = vector.shape_cast %7 : vector<64xf32> to vector<1x64xf32>
    %cst_5 = arith.constant 1.000000e-24 : f32
    %9 = vector.broadcast %cst_5 : f32 to vector<1x64xf32>
    %10 = arith.maximumf %8, %9 : vector<1x64xf32>
    %11 = math.rsqrt %10 : vector<1x64xf32>
    %cst_6 = arith.constant dense<0.000000e+00> : vector<64x64xf32>
    %12 = tpu.matmul %3, %5, %cst_6 {dimension_numbers = #tpu.dot_dimension_numbers<[1], [0], [0], [1], [0, 0, 1, 1], [], []>} : vector<64x128xf32>, vector<128x64xf32>, vector<64x64xf32> -> vector<64x64xf32>
    %13 = vector.broadcast %11 : vector<1x64xf32> to vector<64x64xf32>
    %14 = arith.mulf %12, %13 : vector<64x64xf32>
    %cst_7 = arith.constant dense<0xFF800000> : vector<64xf32>
    %15 = vector.multi_reduction <maximumf>, %14, %cst_7 [0] : vector<64x64xf32> to vector<64xf32>
    %16 = vector.shape_cast %15 : vector<64xf32> to vector<1x64xf32>
    %17 = vector.broadcast %16 : vector<1x64xf32> to vector<64x64xf32>
    %18 = arith.subf %14, %17 : vector<64x64xf32>
    %19 = math.exp %18 : vector<64x64xf32>
    %cst_8 = arith.constant dense<0.000000e+00> : vector<64xf32>
    %20 = vector.multi_reduction <add>, %19, %cst_8 [0] : vector<64x64xf32> to vector<64xf32>
    %21 = vector.shape_cast %20 : vector<64xf32> to vector<1x64xf32>
    %cst_9 = arith.constant 1.000000e+00 : f32
    %22 = vector.broadcast %cst_9 : f32 to vector<1x64xf32>
    %23 = arith.divf %22, %21 : vector<1x64xf32>
    %24 = vector.broadcast %23 : vector<1x64xf32> to vector<64x64xf32>
    %25 = arith.mulf %19, %24 : vector<64x64xf32>
    %26 = vector.broadcast %11 : vector<1x64xf32> to vector<64x64xf32>
    %27 = arith.mulf %25, %26 : vector<64x64xf32>
    %cst_10 = arith.constant dense<0.000000e+00> : vector<64x128xf32>
    %28 = tpu.matmul %27, %5, %cst_10 {dimension_numbers = #tpu.dot_dimension_numbers<[1], [1], [0], [0], [0, 0, 1, 0], [], []>} : vector<64x64xf32>, vector<128x64xf32>, vector<64x128xf32> -> vector<64x128xf32>
    %c0_11 = arith.constant 0 : index
    %c0_12 = arith.constant 0 : index
    %c0_13 = arith.constant 0 : index
    %29 = vector.load %arg6[%c0_11, %c0_12, %c0_13] : memref<2x64x128xf32, #tpu.memory_space<vmem>>, vector<1x64x128xf32>
    %30 = vector.shape_cast %29 : vector<1x64x128xf32> to vector<64x128xf32>
    %31 = arith.addf %30, %28 : vector<64x128xf32>
    %c0_14 = arith.constant 0 : index
    %c0_15 = arith.constant 0 : index
    %c0_16 = arith.constant 0 : index
    %32 = vector.load %arg6[%c0_14, %c0_15, %c0_16] : memref<2x64x128xf32, #tpu.memory_space<vmem>>, vector<1x64x128xf32>
    %33 = vector.shape_cast %32 : vector<1x64x128xf32> to vector<64x128xf32>
    %34 = vector.shape_cast %31 : vector<64x128xf32> to vector<1x64x128xf32>
    tpu.vector_store %arg6[%c0_14, %c0_15, %c0_16], %34 {strides = array<i32>} : memref<2x64x128xf32, #tpu.memory_space<vmem>>, vector<1x64x128xf32>,
    %c0_17 = arith.constant 0 : index
    %c0_18 = arith.constant 0 : index
    %c0_19 = arith.constant 0 : index
    %35 = vector.load %arg7[%c0_17, %c0_18, %c0_19] : memref<2x64x1xf32, #tpu.memory_space<vmem>>, vector<1x64x1xf32>
    %36 = vector.shape_cast %35 : vector<1x64x1xf32> to vector<64x1xf32>
    %cst_20 = arith.constant dense<0.000000e+00> : vector<64xf32>
    %37 = vector.multi_reduction <add>, %25, %cst_20 [1] : vector<64x64xf32> to vector<64xf32>
    %38 = vector.shape_cast %37 : vector<64xf32> to vector<64x1xf32>
    %39 = arith.addf %36, %38 : vector<64x1xf32>
    %c0_21 = arith.constant 0 : index
    %c0_22 = arith.constant 0 : index
    %c0_23 = arith.constant 0 : index
    %40 = vector.load %arg7[%c0_21, %c0_22, %c0_23] : memref<2x64x1xf32, #tpu.memory_space<vmem>>, vector<1x64x1xf32>
    %41 = vector.shape_cast %40 : vector<1x64x1xf32> to vector<64x1xf32>
    %42 = vector.shape_cast %39 : vector<64x1xf32> to vector<1x64x1xf32>
    tpu.vector_store %arg7[%c0_21, %c0_22, %c0_23], %42 {strides = array<i32>} : memref<2x64x1xf32, #tpu.memory_space<vmem>>, vector<1x64x1xf32>,
    %c1 = arith.constant 1 : index
    %c0_24 = arith.constant 0 : index
    %c0_25 = arith.constant 0 : index
    %43 = vector.load %arg2[%c1, %c0_24, %c0_25] : memref<2x128x64xf32, #tpu.memory_space<vmem>>, vector<1x128x64xf32>
    %44 = vector.shape_cast %43 : vector<1x128x64xf32> to vector<128x64xf32>
    %45 = arith.mulf %44, %44 : vector<128x64xf32>
    %cst_26 = arith.constant dense<0.000000e+00> : vector<64xf32>
    %46 = vector.multi_reduction <add>, %45, %cst_26 [0] : vector<128x64xf32> to vector<64xf32>
    %47 = vector.shape_cast %46 : vector<64xf32> to vector<1x64xf32>
    %cst_27 = arith.constant 1.000000e-24 : f32
    %48 = vector.broadcast %cst_27 : f32 to vector<1x64xf32>
    %49 = arith.maximumf %47, %48 : vector<1x64xf32>
    %50 = math.rsqrt %49 : vector<1x64xf32>
    %cst_28 = arith.constant dense<0.000000e+00> : vector<64x64xf32>
    %51 = tpu.matmul %3, %44, %cst_28 {dimension_numbers = #tpu.dot_dimension_numbers<[1], [0], [0], [1], [0, 0, 1, 1], [], []>} : vector<64x128xf32>, vector<128x64xf32>, vector<64x64xf32> -> vector<64x64xf32>
    %52 = vector.broadcast %50 : vector<1x64xf32> to vector<64x64xf32>
    %53 = arith.mulf %51, %52 : vector<64x64xf32>
    %cst_29 = arith.constant dense<0xFF800000> : vector<64xf32>
    %54 = vector.multi_reduction <maximumf>, %53, %cst_29 [0] : vector<64x64xf32> to vector<64xf32>
    %55 = vector.shape_cast %54 : vector<64xf32> to vector<1x64xf32>
    %56 = vector.broadcast %55 : vector<1x64xf32> to vector<64x64xf32>
    %57 = arith.subf %53, %56 : vector<64x64xf32>
    %58 = math.exp %57 : vector<64x64xf32>
    %cst_30 = arith.constant dense<0.000000e+00> : vector<64xf32>
    %59 = vector.multi_reduction <add>, %58, %cst_30 [0] : vector<64x64xf32> to vector<64xf32>
    %60 = vector.shape_cast %59 : vector<64xf32> to vector<1x64xf32>
    %cst_31 = arith.constant 1.000000e+00 : f32
    %61 = vector.broadcast %cst_31 : f32 to vector<1x64xf32>
    %62 = arith.divf %61, %60 : vector<1x64xf32>
    %63 = vector.broadcast %62 : vector<1x64xf32> to vector<64x64xf32>
    %64 = arith.mulf %58, %63 : vector<64x64xf32>
    %65 = vector.broadcast %50 : vector<1x64xf32> to vector<64x64xf32>
    %66 = arith.mulf %64, %65 : vector<64x64xf32>
    %cst_32 = arith.constant dense<0.000000e+00> : vector<64x128xf32>
    %67 = tpu.matmul %66, %44, %cst_32 {dimension_numbers = #tpu.dot_dimension_numbers<[1], [1], [0], [0], [0, 0, 1, 0], [], []>} : vector<64x64xf32>, vector<128x64xf32>, vector<64x128xf32> -> vector<64x128xf32>
    %c1_33 = arith.constant 1 : index
    %c0_34 = arith.constant 0 : index
    %c0_35 = arith.constant 0 : index
    %68 = vector.load %arg6[%c1_33, %c0_34, %c0_35] : memref<2x64x128xf32, #tpu.memory_space<vmem>>, vector<1x64x128xf32>
    %69 = vector.shape_cast %68 : vector<1x64x128xf32> to vector<64x128xf32>
    %70 = arith.addf %69, %67 : vector<64x128xf32>
    %c1_36 = arith.constant 1 : index
    %c0_37 = arith.constant 0 : index
    %c0_38 = arith.constant 0 : index
    %71 = vector.load %arg6[%c1_36, %c0_37, %c0_38] : memref<2x64x128xf32, #tpu.memory_space<vmem>>, vector<1x64x128xf32>
    %72 = vector.shape_cast %71 : vector<1x64x128xf32> to vector<64x128xf32>
    %73 = vector.shape_cast %70 : vector<64x128xf32> to vector<1x64x128xf32>
    tpu.vector_store %arg6[%c1_36, %c0_37, %c0_38], %73 {strides = array<i32>} : memref<2x64x128xf32, #tpu.memory_space<vmem>>, vector<1x64x128xf32>,
    %c1_39 = arith.constant 1 : index
    %c0_40 = arith.constant 0 : index
    %c0_41 = arith.constant 0 : index
    %74 = vector.load %arg7[%c1_39, %c0_40, %c0_41] : memref<2x64x1xf32, #tpu.memory_space<vmem>>, vector<1x64x1xf32>
    %75 = vector.shape_cast %74 : vector<1x64x1xf32> to vector<64x1xf32>
    %cst_42 = arith.constant dense<0.000000e+00> : vector<64xf32>
    %76 = vector.multi_reduction <add>, %64, %cst_42 [1] : vector<64x64xf32> to vector<64xf32>
    %77 = vector.shape_cast %76 : vector<64xf32> to vector<64x1xf32>
    %78 = arith.addf %75, %77 : vector<64x1xf32>
    %c1_43 = arith.constant 1 : index
    %c0_44 = arith.constant 0 : index
    %c0_45 = arith.constant 0 : index
    %79 = vector.load %arg7[%c1_43, %c0_44, %c0_45] : memref<2x64x1xf32, #tpu.memory_space<vmem>>, vector<1x64x1xf32>
    %80 = vector.shape_cast %79 : vector<1x64x1xf32> to vector<64x1xf32>
    %81 = vector.shape_cast %78 : vector<64x1xf32> to vector<1x64x1xf32>
    tpu.vector_store %arg7[%c1_43, %c0_44, %c0_45], %81 {strides = array<i32>} : memref<2x64x1xf32, #tpu.memory_space<vmem>>, vector<1x64x1xf32>,
    %c0_i32_46 = arith.constant 0 : i32
    %82 = arith.cmpi eq, %arg1, %c0_i32_46 : i32
    %83 = arith.extui %82 : i1 to i32
    %c0_i32_47 = arith.constant 0 : i32
    %84 = arith.cmpi ne, %83, %c0_i32_47 : i32
    scf.if %84 {
      %c0_48 = arith.constant 0 : index
      %c0_49 = arith.constant 0 : index
      %c0_50 = arith.constant 0 : index
      %85 = vector.load %arg6[%c0_48, %c0_49, %c0_50] : memref<2x64x128xf32, #tpu.memory_space<vmem>>, vector<2x64x128xf32>
      %c0_51 = arith.constant 0 : index
      %c0_52 = arith.constant 0 : index
      %86 = vector.load %arg4[%c0_51, %c0_52] : memref<64x128xf32, #tpu.memory_space<vmem>>, vector<64x128xf32>
      %87 = vector.shape_cast %86 : vector<64x128xf32> to vector<1x64x128xf32>
      %c0_53 = arith.constant 0 : index
      %c0_54 = arith.constant 0 : index
      %c0_55 = arith.constant 0 : index
      %88 = vector.load %arg7[%c0_53, %c0_54, %c0_55] : memref<2x64x1xf32, #tpu.memory_space<vmem>>, vector<2x64x1xf32>
      %89 = vector.broadcast %87 : vector<1x64x128xf32> to vector<2x64x128xf32>
      %90 = vector.broadcast %88 : vector<2x64x1xf32> to vector<2x64x128xf32>
      %91 = arith.mulf %89, %90 : vector<2x64x128xf32>
      %92 = arith.subf %85, %91 : vector<2x64x128xf32>
      %93 = arith.mulf %92, %92 : vector<2x64x128xf32>
      %cst_56 = arith.constant dense<0.000000e+00> : vector<2x64xf32>
      %94 = vector.multi_reduction <add>, %93, %cst_56 [2] : vector<2x64x128xf32> to vector<2x64xf32>
      %95 = vector.shape_cast %94 : vector<2x64xf32> to vector<2x64x1xf32>
      %cst_57 = arith.constant 1.000000e-24 : f32
      %96 = vector.broadcast %cst_57 : f32 to vector<2x64x1xf32>
      %97 = arith.maximumf %95, %96 : vector<2x64x1xf32>
      %98 = math.rsqrt %97 : vector<2x64x1xf32>
      %99 = arith.mulf %95, %98 : vector<2x64x1xf32>
      %100 = arith.mulf %99, %98 : vector<2x64x1xf32>
      %cst_58 = arith.constant dense<0.000000e+00> : vector<2x1xf32>
      %101 = vector.multi_reduction <add>, %100, %cst_58 [1] : vector<2x64x1xf32> to vector<2x1xf32>
      %102 = vector.shape_cast %101 : vector<2x1xf32> to vector<2x1x1xf32>
      %cst_59 = arith.constant 1.000000e-24 : f32
      %103 = vector.broadcast %cst_59 : f32 to vector<2x1x1xf32>
      %104 = arith.maximumf %102, %103 : vector<2x1x1xf32>
      %105 = math.rsqrt %104 : vector<2x1x1xf32>
      %106 = vector.broadcast %105 : vector<2x1x1xf32> to vector<2x64x1xf32>
      %107 = arith.mulf %98, %106 : vector<2x64x1xf32>
      %108 = vector.broadcast %107 : vector<2x64x1xf32> to vector<2x64x128xf32>
      %109 = arith.mulf %92, %108 : vector<2x64x128xf32>
      %c0_60 = arith.constant 0 : index
      %c0_61 = arith.constant 0 : index
      %c0_62 = arith.constant 0 : index
      %110 = vector.load %arg5[%c0_60, %c0_61, %c0_62] : memref<2x64x128xf32, #tpu.memory_space<vmem>>, vector<2x64x128xf32>
      tpu.vector_store %arg5[%c0_60, %c0_61, %c0_62], %109 {strides = array<i32>} : memref<2x64x128xf32, #tpu.memory_space<vmem>>, vector<2x64x128xf32>,
    } else {
    }
    return
  }
  func.func @transform_0(%arg0: i32, %arg1: i32) -> (i32, i32, i32) {
    %c0_i32 = arith.constant 0 : i32
    %c0_i32_0 = arith.constant 0 : i32
    return %arg0, %c0_i32, %arg1 : i32, i32, i32
  }
  func.func @transform_1(%arg0: i32, %arg1: i32) -> (i32, i32) {
    %c0_i32 = arith.constant 0 : i32
    %c0_i32_0 = arith.constant 0 : i32
    %c0_i32_1 = arith.constant 0 : i32
    return %c0_i32, %c0_i32_0 : i32, i32
  }
  func.func @transform_2(%arg0: i32, %arg1: i32) -> (i32, i32) {
    %c0_i32 = arith.constant 0 : i32
    %c0_i32_0 = arith.constant 0 : i32
    %c0_i32_1 = arith.constant 0 : i32
    return %c0_i32, %c0_i32_0 : i32, i32
  }
  func.func @transform_3(%arg0: i32, %arg1: i32) -> (i32, i32, i32) {
    %c0_i32 = arith.constant 0 : i32
    %c0_i32_0 = arith.constant 0 : i32
    %c0_i32_1 = arith.constant 0 : i32
    return %arg0, %c0_i32, %c0_i32_0 : i32, i32, i32
  }
}

</mosaic_0001>

<llo_original>
// kernel: tpu_custom_call.1
$region0: #{tpu_custom_call.1}
  #allocation0 [shape = 'u32[]', space=smem, size = 0x4, offset = 0x4, fixed_abs, tag = 'smem constant byte address 0x4 - core index']
  #allocation1 [shape = 'u32[144,128]{1,0:T(1,128)}', space=vmem, size = 0x12000, scoped, tag = 'internal scratch']
  #allocation2 [shape = 'f32[2,64,128]{2,1,0:T(8,128)}', space=vmem, size = 0x10000, scoped, tag = 'scratch operand']
  #allocation3 [shape = 'f32[2,64,1]{2,1,0:T(8,128)}', space=vmem, size = 0x10000, scoped, tag = 'scratch operand']
  %s0 = inlined_call_operand.vmem [shape: f32[10,128,64], index: 0, kind: input, shape index: {}]
  %s1 = inlined_call_operand.vmem [shape: f32[64,128], index: 1, kind: input, shape index: {}]
  %s2 = inlined_call_operand.vmem [shape: f32[64,128], index: 2, kind: input, shape index: {}]
  %s3 = inlined_call_operand.hbm [shape: f32[10,64,128], index: 3, kind: output, shape index: {}]
  %s4 = sld [smem:[#allocation0]]
  $region53: #{tpu_custom_call.1} parent=0
    _
  %s6 = ssub.s32 1, %s4
  %s7 = scalar_select 0, %s6, %s4
  $region1: #{tpu_custom_call.1} parent=0
    #allocation4 [shape = 'u8[131072]{0}', space=vmem, size = 0x20000, scoped, tag = 'output window, operand 0']
    #allocation5 [shape = 's32[2]{0}', space=sflag, size = 0x8, scoped, tag = 'scoped memory for tpu_custom_call.1']
    %8 = vsyncpa [#allocation5], 0
    %s9 = scalar_lea.sflag [#allocation5], 1
    %10 = vsyncpa %s9, 0
    loop: start=0, step=1, limit=7
    $region2: #{tpu_custom_call.1} parent=1 // loop_pre_header
      _
    $region3: #{tpu_custom_call.1} parent=1 // loop_header
      %s12 = sphi 0, %s16
      %p13 = scmp.ge.s32.totalorder %s12, 7
      %s19 = sphi 0, %s31
      %s20 = sphi 0, %s27
      %s21 = sphi 0, %s19
      %s22 = sphi 0, %s20
      %s23 = sphi 0, %s21
      %s24 = sphi 0, %s22
      %s36 = sphi 0, %s38
      %s39 = sphi 0, %s36
      %s40 = sphi 0, %s39
      %s56 = sphi 0, %s40
      %s60 = sphi 0, %s60
      %s62 = sphi 0, %s60
      %s63 = sphi 0, %s62
      %s77 = sphi 0, %s63
      %s81 = sphi 0, %s81
      %s83 = sphi 0, %s81
      %s84 = sphi 0, %s83
      %s98 = sphi 0, %s84
      %s104 = sphi 0, %s106
      %s107 = sphi 0, %s104
      %s108 = sphi 0, %s107
      %s124 = sphi 0, %s108
    $region4: #{tpu_custom_call.1} parent=1 // loop_header_branch
      %15 = sbr.rel (%p13) target = $region8
    $region5: #{tpu_custom_call.1} parent=1 // loop_body
      %s17 = ssub.s32 %s12, 1
      %s18 = ssub.s32 %s12, 2
      %s25 = sadd.s32 1, %s20
      %p26 = scmp.ge.s32.totalorder %s25, 1
      %s27 = scalar_select %p26, 0, %s25
      %s28 = sadd.s32 1, %s19
      %s29 = scalar_select %p26, %s28, %s19
      %p30 = scmp.ge.s32.totalorder %s29, 5
      %s31 = scalar_select %p30, 0, %s29
      %s32 = ssub.s32 %s19, %s31
      %s33 = ssub.s32 %s20, %s27
      %s34 = sor.u32 %s32, %s33
      %p35 = scmp.eq.s32.totalorder %s34, 0
      %s37 = sadd.s32 %s36, 1
      %s38 = scalar_select %p35, %s36, %s37
      %p41 = pneg %p35
      %p42 = scmp.eq.s32.totalorder %s12, 4
      %p43 = por %p41, %p42
      %p44 = scmp.ne.s32.totalorder %s36, %s39
      %p45 = scmp.eq.s32.totalorder %s12, 0
      %p46 = por %p44, %p45
      %p47 = scmp.ne.s32.totalorder %s36, %s39
      %p48 = scmp.eq.s32.totalorder %s17, 4
      %p49 = por %p47, %p48
      %p50 = scmp.ne.s32.totalorder %s39, %s40
      %p51 = scmp.eq.s32.totalorder %s17, 0
      %p52 = por %p50, %p51
      %p53 = scmp.ne.s32.totalorder %s39, %s40
      %p54 = scmp.eq.s32.totalorder %s18, 4
      %p55 = por %p53, %p54
      %p57 = scmp.ne.s32.totalorder %s40, %s56
      %p58 = scmp.eq.s32.totalorder %s18, 0
      %p59 = por %p57, %p58
      %s61 = sadd.s32 %s60, 1
      %p64 = scmp.eq.s32.totalorder %s12, 4
      %p65 = scmp.ne.s32.totalorder %s60, %s62
      %p66 = scmp.eq.s32.totalorder %s12, 0
      %p67 = por %p65, %p66
      %p68 = scmp.ne.s32.totalorder %s60, %s62
      %p69 = scmp.eq.s32.totalorder %s17, 4
      %p70 = por %p68, %p69
      %p71 = scmp.ne.s32.totalorder %s62, %s63
      %p72 = scmp.eq.s32.totalorder %s17, 0
      %p73 = por %p71, %p72
      %p74 = scmp.ne.s32.totalorder %s62, %s63
      %p75 = scmp.eq.s32.totalorder %s18, 4
      %p76 = por %p74, %p75
      %p78 = scmp.ne.s32.totalorder %s63, %s77
      %p79 = scmp.eq.s32.totalorder %s18, 0
      %p80 = por %p78, %p79
      %s82 = sadd.s32 %s81, 1
      %p85 = scmp.eq.s32.totalorder %s12, 4
      %p86 = scmp.ne.s32.totalorder %s81, %s83
      %p87 = scmp.eq.s32.totalorder %s12, 0
      %p88 = por %p86, %p87
      %p89 = scmp.ne.s32.totalorder %s81, %s83
      %p90 = scmp.eq.s32.totalorder %s17, 4
      %p91 = por %p89, %p90
      %p92 = scmp.ne.s32.totalorder %s83, %s84
      %p93 = scmp.eq.s32.totalorder %s17, 0
      %p94 = por %p92, %p93
      %p95 = scmp.ne.s32.totalorder %s83, %s84
      %p96 = scmp.eq.s32.totalorder %s18, 4
      %p97 = por %p95, %p96
      %p99 = scmp.ne.s32.totalorder %s84, %s98
      %p100 = scmp.eq.s32.totalorder %s18, 0
      %p101 = por %p99, %p100
      %s102 = ssub.s32 %s19, %s31
      %p103 = scmp.eq.s32.totalorder %s102, 0
      %s105 = sadd.s32 %s104, 1
      %s106 = scalar_select %p103, %s104, %s105
      %p109 = pneg %p103
      %p110 = scmp.eq.s32.totalorder %s12, 4
      %p111 = por %p109, %p110
      %p112 = scmp.ne.s32.totalorder %s104, %s107
      %p113 = scmp.eq.s32.totalorder %s12, 0
      %p114 = por %p112, %p113
      %p115 = scmp.ne.s32.totalorder %s104, %s107
      %p116 = scmp.eq.s32.totalorder %s17, 4
      %p117 = por %p115, %p116
      %p118 = scmp.ne.s32.totalorder %s107, %s108
      %p119 = scmp.eq.s32.totalorder %s17, 0
      %p120 = por %p118, %p119
      %p121 = scmp.ne.s32.totalorder %s107, %s108
      %p122 = scmp.eq.s32.totalorder %s18, 4
      %p123 = por %p121, %p122
      %p125 = scmp.ne.s32.totalorder %s108, %s124
      %p126 = scmp.eq.s32.totalorder %s18, 0
      %p127 = por %p125, %p126
      %p128 = scmp.le.s32.totalorder 1, %s12
      %p129 = scmp.lt.s32.totalorder %s12, 6
      %p130 = pnand %p128, %p129
      %p131 = pneg %p130
      // Predicated region
      $region9: #{tpu_custom_call.1} parent=5 // pred_check
        _
      $region10: #{tpu_custom_call.1} parent=5 // pred_check_branch
        %133 = sbr.rel (%p130) target = $region12
      $region11: #{tpu_custom_call.1} parent=5 // pred_region
        %s134 = ssub.s32 %s12, 1
        // Predicated region
        $region13: #{tpu_custom_call.1} parent=11 // pred_check
          %p135 = pneg %p73
        $region14: #{tpu_custom_call.1} parent=11 // pred_check_branch
          %137 = sbr.rel (%p135) target = $region16
        $region15: #{tpu_custom_call.1} parent=11 // pred_region
          _
        $region16: #{tpu_custom_call.1} parent=11 // pred_fallthru
          _
        // Predicated region
        $region17: #{tpu_custom_call.1} parent=11 // pred_check
          %p138 = pneg %p94
        $region18: #{tpu_custom_call.1} parent=11 // pred_check_branch
          %140 = sbr.rel (%p138) target = $region20
        $region19: #{tpu_custom_call.1} parent=11 // pred_region
          _
        $region20: #{tpu_custom_call.1} parent=11 // pred_fallthru
          _
      $region12: #{tpu_custom_call.1} parent=5 // pred_fallthru
        _
      %p141 = scmp.lt.s32.totalorder %s12, 5
      // Predicated region
      $region21: #{tpu_custom_call.1} parent=5 // pred_check
        %p142 = pneg %p141
      $region22: #{tpu_custom_call.1} parent=5 // pred_check_branch
        %144 = sbr.rel (%p142) target = $region24
      $region23: #{tpu_custom_call.1} parent=5 // pred_region
        // Predicated region
        $region25: #{tpu_custom_call.1} parent=23 // pred_check
          %p145 = pneg %p46
        $region26: #{tpu_custom_call.1} parent=23 // pred_check_branch
          %147 = sbr.rel (%p145) target = $region28
        $region27: #{tpu_custom_call.1} parent=23 // pred_region
          %s148 = smul.u32 2, %s19
          %p149 = scmp.lt.s32.totalorder %s148, 9
          %s150 = scalar_select %p149, %s148, 9
          %p151 = scmp.lt.s32.totalorder %s20, 0
          %s152 = scalar_select %p151, %s20, 0
          %s153 = smul.addr %s150, 16
          %s154 = sadd.s32 %s152, %s153
          %s155 = smul.addr %s154, 8
          %s156 = scalar_lea.vmem %s0, %s155
          %s157 = smul.u32 2, %s19
        $region28: #{tpu_custom_call.1} parent=23 // pred_fallthru
          _
      $region24: #{tpu_custom_call.1} parent=5 // pred_fallthru
        _
      %p158 = scmp.le.s32.totalorder 1, %s12
      %p159 = scmp.lt.s32.totalorder %s12, 6
      %p160 = pnand %p158, %p159
      %p161 = pneg %p160
      // Predicated region
      $region29: #{tpu_custom_call.1} parent=5 // pred_check
        _
      $region30: #{tpu_custom_call.1} parent=5 // pred_check_branch
        %163 = sbr.rel (%p160) target = $region32
      $region31: #{tpu_custom_call.1} parent=5 // pred_region
        %s164 = ssub.s32 %s12, 1
        %s165 = smul.u32 2, %s21
        %p166 = scmp.lt.s32.totalorder %s165, 9
        %s167 = scalar_select %p166, %s165, 9
        %p168 = scmp.lt.s32.totalorder %s22, 0
        %s169 = scalar_select %p168, %s22, 0
        %s170 = smul.addr %s167, 16
        %s171 = sadd.s32 %s169, %s170
        %s172 = smul.addr %s171, 8
        %s173 = scalar_lea.vmem %s0, %s172
        %p174 = pneg %p52
        %p175 = pneg %p49
        %p176 = pneg %p73
        %p177 = pneg %p70
        %p178 = pneg %p94
        %p179 = pneg %p91
        %p180 = pneg %p120
        %p181 = pneg %p117
        %s182 = sand.u32 %s107, 1
        %s183 = scalar_lea.sflag [#allocation5], %s182
        %s184 = sand.u32 %s107, 1
        %s185 = smul.addr %s184, 128
        %s186 = scalar_lea.vmem [#allocation4], %s185
        %s187 = smul.u32 2, %s21
        %p188 = scmp.lt.s32.totalorder %s187, 9
        %s189 = scalar_select %p188, %s187, 9
        %p190 = scmp.lt.s32.totalorder %s22, 0
        %s191 = scalar_select %p190, %s22, 0
        %s192 = smul.addr %s189, 16
        %s193 = sadd.s32 %s191, %s192
        %s194 = smul.addr %s193, 8
        %s195 = scalar_lea.vmem %s0, %s194
        %s196 = smul.u32 2, %s21
        %s197 = smul.u32 2, %s21
        %p198 = scmp.eq.s32.totalorder %s22, 0
        // Predicated region
        $region33: #{tpu_custom_call.1} parent=31 // pred_check
          %p199 = pneg %p198
        $region34: #{tpu_custom_call.1} parent=31 // pred_check_branch
          %201 = sbr.rel (%p199) target = $region36
        $region35: #{tpu_custom_call.1} parent=31 // pred_region
          %202 = vst [vmem:[#allocation2] sm:$0xff] 0.0
          %203 = vst [vmem:[#allocation2 + $0x8] sm:$0xff] 0.0
          %204 = vst [vmem:[#allocation2 + $0x10] sm:$0xff] 0.0
          %205 = vst [vmem:[#allocation2 + $0x18] sm:$0xff] 0.0
          %206 = vst [vmem:[#allocation2 + $0x20] sm:$0xff] 0.0
          %207 = vst [vmem:[#allocation2 + $0x28] sm:$0xff] 0.0
          %208 = vst [vmem:[#allocation2 + $0x30] sm:$0xff] 0.0
          %209 = vst [vmem:[#allocation2 + $0x38] sm:$0xff] 0.0
          %210 = vst [vmem:[#allocation2 + $0x40] sm:$0xff] 0.0
          %211 = vst [vmem:[#allocation2 + $0x48] sm:$0xff] 0.0
          %212 = vst [vmem:[#allocation2 + $0x50] sm:$0xff] 0.0
          %213 = vst [vmem:[#allocation2 + $0x58] sm:$0xff] 0.0
          %214 = vst [vmem:[#allocation2 + $0x60] sm:$0xff] 0.0
          %215 = vst [vmem:[#allocation2 + $0x68] sm:$0xff] 0.0
          %216 = vst [vmem:[#allocation2 + $0x70] sm:$0xff] 0.0
          %217 = vst [vmem:[#allocation2 + $0x78] sm:$0xff] 0.0
          %vm218 = vcmask 7168
          %219 = vst.msk [vmem:[#allocation3] sm:$0xff] %vm218, 0.0
          %220 = vst.msk [vmem:[#allocation3 + $0x8] sm:$0xff] %vm218, 0.0
          %221 = vst.msk [vmem:[#allocation3 + $0x10] sm:$0xff] %vm218, 0.0
          %222 = vst.msk [vmem:[#allocation3 + $0x18] sm:$0xff] %vm218, 0.0
          %223 = vst.msk [vmem:[#allocation3 + $0x20] sm:$0xff] %vm218, 0.0
          %224 = vst.msk [vmem:[#allocation3 + $0x28] sm:$0xff] %vm218, 0.0
          %225 = vst.msk [vmem:[#allocation3 + $0x30] sm:$0xff] %vm218, 0.0
          %226 = vst.msk [vmem:[#allocation3 + $0x38] sm:$0xff] %vm218, 0.0
          %227 = vst.msk [vmem:[#allocation3 + $0x40] sm:$0xff] %vm218, 0.0
          %228 = vst.msk [vmem:[#allocation3 + $0x48] sm:$0xff] %vm218, 0.0
          %229 = vst.msk [vmem:[#allocation3 + $0x50] sm:$0xff] %vm218, 0.0
          %230 = vst.msk [vmem:[#allocation3 + $0x58] sm:$0xff] %vm218, 0.0
          %231 = vst.msk [vmem:[#allocation3 + $0x60] sm:$0xff] %vm218, 0.0
          %232 = vst.msk [vmem:[#allocation3 + $0x68] sm:$0xff] %vm218, 0.0
          %233 = vst.msk [vmem:[#allocation3 + $0x70] sm:$0xff] %vm218, 0.0
          %234 = vst.msk [vmem:[#allocation3 + $0x78] sm:$0xff] %vm218, 0.0
        $region36: #{tpu_custom_call.1} parent=31 // pred_fallthru
          _
        %v235 = vld [vmem:[%s1] sm:$0xff]
        %v236 = vld [vmem:[%s1 + $0x8] sm:$0xff]
        %v237 = vld [vmem:[%s1 + $0x10] sm:$0xff]
        %v238 = vld [vmem:[%s1 + $0x18] sm:$0xff]
        %v239 = vld [vmem:[%s1 + $0x20] sm:$0xff]
        %v240 = vld [vmem:[%s1 + $0x28] sm:$0xff]
        %v241 = vld [vmem:[%s1 + $0x30] sm:$0xff]
        %v242 = vld [vmem:[%s1 + $0x38] sm:$0xff]
        %v243 = vld [vmem:[%s195] sm:$0xff]
        %v244 = vld [vmem:[%s195 + $0x8] sm:$0xff]
        %v245 = vld [vmem:[%s195 + $0x10] sm:$0xff]
        %v246 = vld [vmem:[%s195 + $0x18] sm:$0xff]
        %v247 = vld [vmem:[%s195 + $0x20] sm:$0xff]
        %v248 = vld [vmem:[%s195 + $0x28] sm:$0xff]
        %v249 = vld [vmem:[%s195 + $0x30] sm:$0xff]
        %v250 = vld [vmem:[%s195 + $0x38] sm:$0xff]
        %v251 = vld [vmem:[%s195 + $0x40] sm:$0xff]
        %v252 = vld [vmem:[%s195 + $0x48] sm:$0xff]
        %v253 = vld [vmem:[%s195 + $0x50] sm:$0xff]
        %v254 = vld [vmem:[%s195 + $0x58] sm:$0xff]
        %v255 = vld [vmem:[%s195 + $0x60] sm:$0xff]
        %v256 = vld [vmem:[%s195 + $0x68] sm:$0xff]
        %v257 = vld [vmem:[%s195 + $0x70] sm:$0xff]
        %v258 = vld [vmem:[%s195 + $0x78] sm:$0xff]
        %v259 = vmul.f32 %v243, %v243
        %v260 = vmul.f32 %v244, %v244
        %v261 = vmul.f32 %v245, %v245
        %v262 = vmul.f32 %v246, %v246
        %v263 = vmul.f32 %v247, %v247
        %v264 = vmul.f32 %v248, %v248
        %v265 = vmul.f32 %v249, %v249
        %v266 = vmul.f32 %v250, %v250
        %v267 = vmul.f32 %v251, %v251
        %v268 = vmul.f32 %v252, %v252
        %v269 = vmul.f32 %v253, %v253
        %v270 = vmul.f32 %v254, %v254
        %v271 = vmul.f32 %v255, %v255
        %v272 = vmul.f32 %v256, %v256
        %v273 = vmul.f32 %v257, %v257
        %v274 = vmul.f32 %v258, %v258
        %vm275 = vcmask 523264
        %v276 = vsel %vm275, %v259, 0.0
        %v277 = vsel %vm275, %v260, 0.0
        %v278 = vadd.f32 %v276, %v277
        %v279 = vsel %vm275, %v261, 0.0
        %v280 = vadd.f32 %v278, %v279
        %v281 = vsel %vm275, %v262, 0.0
        %v282 = vadd.f32 %v280, %v281
        %v283 = vsel %vm275, %v263, 0.0
        %v284 = vadd.f32 %v282, %v283
        %v285 = vsel %vm275, %v264, 0.0
        %v286 = vadd.f32 %v284, %v285
        %v287 = vsel %vm275, %v265, 0.0
        %v288 = vadd.f32 %v286, %v287
        %v289 = vsel %vm275, %v266, 0.0
        %v290 = vadd.f32 %v288, %v289
        %v291 = vsel %vm275, %v267, 0.0
        %v292 = vadd.f32 %v290, %v291
        %v293 = vsel %vm275, %v268, 0.0
        %v294 = vadd.f32 %v292, %v293
        %v295 = vsel %vm275, %v269, 0.0
        %v296 = vadd.f32 %v294, %v295
        %v297 = vsel %vm275, %v270, 0.0
        %v298 = vadd.f32 %v296, %v297
        %v299 = vsel %vm275, %v271, 0.0
        %v300 = vadd.f32 %v298, %v299
        %v301 = vsel %vm275, %v272, 0.0
        %v302 = vadd.f32 %v300, %v301
        %v303 = vsel %vm275, %v273, 0.0
        %v304 = vadd.f32 %v302, %v303
        %v305 = vsel %vm275, %v274, 0.0
        %v306 = vadd.f32 %v304, %v305
        %v307 = vrot.slane %v306, 4
        %v308 = vadd.f32 %v306, %v307
        %v309 = vrot.slane %v308, 2
        %v310 = vadd.f32 %v308, %v309
        %v311 = vrot.slane %v310, 1
        %v312 = vadd.f32 %v310, %v311
        %v313 = vmax.f32 %v312, 1e-24
        %v314 = vrsqrt.pop %v313
        %315 = vmatprep.subr.mxu0 0.0
        %316 = vmatpush1.msra.mxu0 %v243
        %317 = vmatprep.subr.mxu0 0.0
        %318 = vmatpush1.msra.mxu0 %v244
        %319 = vmatprep.subr.mxu0 0.0
        %320 = vmatpush1.msra.mxu0 %v245
        %321 = vmatprep.subr.mxu0 0.0
        %322 = vmatpush1.msra.mxu0 %v246
        %323 = vmatprep.subr.mxu0 0.0
        %324 = vmatpush1.msra.mxu0 %v247
        %325 = vmatprep.subr.mxu0 0.0
        %326 = vmatpush1.msra.mxu0 %v248
        %327 = vmatprep.subr.mxu0 0.0
        %328 = vmatpush1.msra.mxu0 %v249
        %329 = vmatprep.subr.mxu0 0.0
        %330 = vmatpush1.msra.mxu0 %v250
        %331 = vmatprep.subr.mxu0 0.0
        %332 = vmatpush1.msra.mxu0 %v251
        %333 = vmatprep.subr.mxu0 0.0
        %334 = vmatpush1.msra.mxu0 %v252
        %335 = vmatprep.subr.mxu0 0.0
        %336 = vmatpush1.msra.mxu0 %v253
        %337 = vmatprep.subr.mxu0 0.0
        %338 = vmatpush1.msra.mxu0 %v254
        %339 = vmatprep.subr.mxu0 0.0
        %340 = vmatpush1.msra.mxu0 %v255
        %341 = vmatprep.subr.mxu0 0.0
        %342 = vmatpush1.msra.mxu0 %v256
        %343 = vmatprep.subr.mxu0 0.0
        %344 = vmatpush1.msra.mxu0 %v257
        %345 = vmatprep.subr.mxu0 0.0
        %346 = vmatpush1.msra.mxu0 %v258
        %347 = vmatprep.subr.mxu0 0.0
        %348 = vmatpush1.msra.mxu0 0.0
        %349 = vmatprep.subr.mxu0 0.0
        %350 = vmatpush1.msra.mxu0 0.0
        %351 = vmatprep.subr.mxu0 0.0
        %352 = vmatpush1.msra.mxu0 0.0
        %353 = vmatprep.subr.mxu0 0.0
        %354 = vmatpush1.msra.mxu0 0.0
        %355 = vmatprep.subr.mxu0 0.0
        %356 = vmatpush1.msra.mxu0 0.0
        %357 = vmatprep.subr.mxu0 0.0
        %358 = vmatpush1.msra.mxu0 0.0
        %359 = vmatprep.subr.mxu0 0.0
        %360 = vmatpush1.msra.mxu0 0.0
        %361 = vmatprep.subr.mxu0 0.0
        %362 = vmatpush1.msra.mxu0 0.0
        %363 = vmatprep.subr.mxu0 0.0
        %364 = vmatpush1.msra.mxu0 0.0
        %365 = vmatprep.subr.mxu0 0.0
        %366 = vmatpush1.msra.mxu0 0.0
        %367 = vmatprep.subr.mxu0 0.0
        %368 = vmatpush1.msra.mxu0 0.0
        %369 = vmatprep.subr.mxu0 0.0
        %370 = vmatpush1.msra.mxu0 0.0
        %371 = vmatprep.subr.mxu0 0.0
        %372 = vmatpush1.msra.mxu0 0.0
        %373 = vmatprep.subr.mxu0 0.0
        %374 = vmatpush1.msra.mxu0 0.0
        %375 = vmatprep.subr.mxu0 0.0
        %376 = vmatpush1.msra.mxu0 0.0
        %377 = vmatprep.subr.mxu0 0.0
        %378 = vmatpush1.msra.mxu0 0.0
        %379 = vmatprep.mubr.f32.mxu0 0.0
        %380 = vmatmul.mubr.f32.gmra.mrb[0].mxu0 %v235
        %v381 = vpop.f32.mrb[0].mxu0
        %v382 = vadd.f32 0.0, %v381
        %v383 = vpop.f32.mrb[0].mxu0
        %384 = vmatprep.mubr.f32.mxu0 0.0
        %385 = vmatmul.mubr.f32.gmra.mrb[0].mxu0 %v236
        %v386 = vpop.f32.mrb[0].mxu0
        %v387 = vadd.f32 0.0, %v386
        %v388 = vpop.f32.mrb[0].mxu0
        %389 = vmatprep.mubr.f32.mxu0 0.0
        %390 = vmatmul.mubr.f32.gmra.mrb[0].mxu0 %v237
        %v391 = vpop.f32.mrb[0].mxu0
        %v392 = vadd.f32 0.0, %v391
        %v393 = vpop.f32.mrb[0].mxu0
        %394 = vmatprep.mubr.f32.mxu0 0.0
        %395 = vmatmul.mubr.f32.gmra.mrb[0].mxu0 %v238
        %v396 = vpop.f32.mrb[0].mxu0
        %v397 = vadd.f32 0.0, %v396
        %v398 = vpop.f32.mrb[0].mxu0
        %399 = vmatprep.mubr.f32.mxu0 0.0
        %400 = vmatmul.mubr.f32.gmra.mrb[0].mxu0 %v239
        %v401 = vpop.f32.mrb[0].mxu0
        %v402 = vadd.f32 0.0, %v401
        %v403 = vpop.f32.mrb[0].mxu0
        %404 = vmatprep.mubr.f32.mxu0 0.0
        %405 = vmatmul.mubr.f32.gmra.mrb[0].mxu0 %v240
        %v406 = vpop.f32.mrb[0].mxu0
        %v407 = vadd.f32 0.0, %v406
        %v408 = vpop.f32.mrb[0].mxu0
        %409 = vmatprep.mubr.f32.mxu0 0.0
        %410 = vmatmul.mubr.f32.gmra.mrb[0].mxu0 %v241
        %v411 = vpop.f32.mrb[0].mxu0
        %v412 = vadd.f32 0.0, %v411
        %v413 = vpop.f32.mrb[0].mxu0
        %414 = vmatprep.mubr.f32.mxu0 0.0
        %415 = vmatmul.mubr.f32.gmra.mrb[0].mxu0 %v242
        %v416 = vpop.f32.mrb[0].mxu0
        %v417 = vadd.f32 0.0, %v416
        %v418 = vpop.f32.mrb[0].mxu0
        %419 = vdwg.mxu0
        %v420 = vmul.f32 %v382, %v314
        %v421 = vmul.f32 %v387, %v314
        %v422 = vmul.f32 %v392, %v314
        %v423 = vmul.f32 %v397, %v314
        %v424 = vmul.f32 %v402, %v314
        %v425 = vmul.f32 %v407, %v314
        %v426 = vmul.f32 %v412, %v314
        %v427 = vmul.f32 %v417, %v314
        %v428 = vsel %vm275, %v420, -inf
        %v429 = vsel %vm275, %v421, -inf
        %v430 = vsel %vm275, %v422, -inf
        %v431 = vsel %vm275, %v423, -inf
        %v432 = vsel %vm275, %v424, -inf
        %v433 = vmax.f32 %v428, %v432
        %v434 = vsel %vm275, %v425, -inf
        %v435 = vmax.f32 %v429, %v434
        %v436 = vsel %vm275, %v426, -inf
        %v437 = vmax.f32 %v430, %v436
        %v438 = vsel %vm275, %v427, -inf
        %v439 = vmax.f32 %v431, %v438
        %v440 = vmax.f32 %v433, %v435
        %v441 = vmax.f32 %v437, %v439
        %v442 = vmax.f32 %v440, %v441
        %v443 = vrot.slane %v442, 4
        %v444 = vmax.f32 %v442, %v443
        %v445 = vrot.slane %v444, 2
        %v446 = vmax.f32 %v444, %v445
        %v447 = vrot.slane %v446, 1
        %v448 = vmax.f32 %v446, %v447
        %v449 = vsub.f32 %v420, %v448
        %v450 = vsub.f32 %v421, %v448
        %v451 = vsub.f32 %v422, %v448
        %v452 = vsub.f32 %v423, %v448
        %v453 = vsub.f32 %v424, %v448
        %v454 = vsub.f32 %v425, %v448
        %v455 = vsub.f32 %v426, %v448
        %v456 = vsub.f32 %v427, %v448
        %v457 = vmul.f32 %v449, 1.442695
        %v458 = vpow.pop %v457
        %v459 = vmul.f32 %v450, 1.442695
        %v460 = vpow.pop %v459
        %v461 = vmul.f32 %v451, 1.442695
        %v462 = vpow.pop %v461
        %v463 = vmul.f32 %v452, 1.442695
        %v464 = vpow.pop %v463
        %v465 = vmul.f32 %v453, 1.442695
        %v466 = vpow.pop %v465
        %v467 = vmul.f32 %v454, 1.442695
        %v468 = vpow.pop %v467
        %v469 = vmul.f32 %v455, 1.442695
        %v470 = vpow.pop %v469
        %v471 = vmul.f32 %v456, 1.442695
        %v472 = vpow.pop %v471
        %v473 = vsel %vm275, %v458, 0.0
        %v474 = vsel %vm275, %v460, 0.0
        %v475 = vadd.f32 %v473, %v474
        %v476 = vsel %vm275, %v462, 0.0
        %v477 = vadd.f32 %v475, %v476
        %v478 = vsel %vm275, %v464, 0.0
        %v479 = vadd.f32 %v477, %v478
        %v480 = vsel %vm275, %v466, 0.0
        %v481 = vadd.f32 %v479, %v480
        %v482 = vsel %vm275, %v468, 0.0
        %v483 = vadd.f32 %v481, %v482
        %v484 = vsel %vm275, %v470, 0.0
        %v485 = vadd.f32 %v483, %v484
        %v486 = vsel %vm275, %v472, 0.0
        %v487 = vadd.f32 %v485, %v486
        %v488 = vrot.slane %v487, 4
        %v489 = vadd.f32 %v487, %v488
        %v490 = vrot.slane %v489, 2
        %v491 = vadd.f32 %v489, %v490
        %v492 = vrot.slane %v491, 1
        %v493 = vadd.f32 %v491, %v492
        %v494 = vrcp.pop %v493
        %v495 = vmul.f32 1.0, %v494
        %v496 = vmul.f32 %v458, %v495
        %v497 = vmul.f32 %v460, %v495
        %v498 = vmul.f32 %v462, %v495
        %v499 = vmul.f32 %v464, %v495
        %v500 = vmul.f32 %v466, %v495
        %v501 = vmul.f32 %v468, %v495
        %v502 = vmul.f32 %v470, %v495
        %v503 = vmul.f32 %v472, %v495
        %v504 = vmul.f32 %v496, %v314
        %v505 = vmul.f32 %v497, %v314
        %v506 = vmul.f32 %v498, %v314
        %v507 = vmul.f32 %v499, %v314
        %v508 = vmul.f32 %v500, %v314
        %v509 = vmul.f32 %v501, %v314
        %v510 = vmul.f32 %v502, %v314
        %v511 = vmul.f32 %v503, %v314
        %v513 = vsel %vm275, %v504, 0
        %v516 = vsel %vm275, %v505, 0
        %v519 = vsel %vm275, %v506, 0
        %v522 = vsel %vm275, %v507, 0
        %v525 = vsel %vm275, %v508, 0
        %v528 = vsel %vm275, %v509, 0
        %v531 = vsel %vm275, %v510, 0
        %v534 = vsel %vm275, %v511, 0
        %v537 = vsel %vm275, %v243, 0
        %v540 = vsel %vm275, %v244, 0
        %v543 = vsel %vm275, %v245, 0
        %v546 = vsel %vm275, %v246, 0
        %v549 = vsel %vm275, %v247, 0
        %v552 = vsel %vm275, %v248, 0
        %v555 = vsel %vm275, %v249, 0
        %v558 = vsel %vm275, %v250, 0
        %v561 = vsel %vm275, %v251, 0
        %v564 = vsel %vm275, %v252, 0
        %v567 = vsel %vm275, %v253, 0
        %v570 = vsel %vm275, %v254, 0
        %v573 = vsel %vm275, %v255, 0
        %v576 = vsel %vm275, %v256, 0
        %v579 = vsel %vm275, %v257, 0
        %v582 = vsel %vm275, %v258, 0
        %584 = vmatprep.subr.mxu0 0.0
        %585 = vmatpush1.xpose.msra.mxu0 %v537
        %586 = vmatprep.subr.mxu0 0.0
        %587 = vmatpush1.xpose.msra.mxu0 %v540
        %588 = vmatprep.subr.mxu0 0.0
        %589 = vmatpush1.xpose.msra.mxu0 %v543
        %590 = vmatprep.subr.mxu0 0.0
        %591 = vmatpush1.xpose.msra.mxu0 %v546
        %592 = vmatprep.subr.mxu0 0.0
        %593 = vmatpush1.xpose.msra.mxu0 %v549
        %594 = vmatprep.subr.mxu0 0.0
        %595 = vmatpush1.xpose.msra.mxu0 %v552
        %596 = vmatprep.subr.mxu0 0.0
        %597 = vmatpush1.xpose.msra.mxu0 %v555
        %598 = vmatprep.subr.mxu0 0.0
        %599 = vmatpush1.xpose.msra.mxu0 %v558
        %600 = vmatprep.subr.mxu0 0.0
        %601 = vmatpush1.xpose.msra.mxu0 %v561
        %602 = vmatprep.subr.mxu0 0.0
        %603 = vmatpush1.xpose.msra.mxu0 %v564
        %604 = vmatprep.subr.mxu0 0.0
        %605 = vmatpush1.xpose.msra.mxu0 %v567
        %606 = vmatprep.subr.mxu0 0.0
        %607 = vmatpush1.xpose.msra.mxu0 %v570
        %608 = vmatprep.subr.mxu0 0.0
        %609 = vmatpush1.xpose.msra.mxu0 %v573
        %610 = vmatprep.subr.mxu0 0.0
        %611 = vmatpush1.xpose.msra.mxu0 %v576
        %612 = vmatprep.subr.mxu0 0.0
        %613 = vmatpush1.xpose.msra.mxu0 %v579
        %614 = vmatprep.subr.mxu0 0.0
        %615 = vmatpush1.xpose.msra.mxu0 %v582
        %616 = vmatprep.subr.mxu0 0.0
        %617 = vmatpush1.xpose.msra.mxu0 0.0
        %618 = vmatprep.subr.mxu0 0.0
        %619 = vmatpush1.xpose.msra.mxu0 0.0
        %620 = vmatprep.subr.mxu0 0.0
        %621 = vmatpush1.xpose.msra.mxu0 0.0
        %622 = vmatprep.subr.mxu0 0.0
        %623 = vmatpush1.xpose.msra.mxu0 0.0
        %624 = vmatprep.subr.mxu0 0.0
        %625 = vmatpush1.xpose.msra.mxu0 0.0
        %626 = vmatprep.subr.mxu0 0.0
        %627 = vmatpush1.xpose.msra.mxu0 0.0
        %628 = vmatprep.subr.mxu0 0.0
        %629 = vmatpush1.xpose.msra.mxu0 0.0
        %630 = vmatprep.subr.mxu0 0.0
        %631 = vmatpush1.xpose.msra.mxu0 0.0
        %632 = vmatprep.subr.mxu0 0.0
        %633 = vmatpush1.xpose.msra.mxu0 0.0
        %634 = vmatprep.subr.mxu0 0.0
        %635 = vmatpush1.xpose.msra.mxu0 0.0
        %636 = vmatprep.subr.mxu0 0.0
        %637 = vmatpush1.xpose.msra.mxu0 0.0
        %638 = vmatprep.subr.mxu0 0.0
        %639 = vmatpush1.xpose.msra.mxu0 0.0
        %640 = vmatprep.subr.mxu0 0.0
        %641 = vmatpush1.xpose.msra.mxu0 0.0
        %642 = vmatprep.subr.mxu0 0.0
        %643 = vmatpush1.xpose.msra.mxu0 0.0
        %644 = vmatprep.subr.mxu0 0.0
        %645 = vmatpush1.xpose.msra.mxu0 0.0
        %646 = vmatprep.subr.mxu0 0.0
        %647 = vmatpush1.xpose.msra.mxu0 0.0
        %648 = vmatprep.mubr.f32.mxu0 0.0
        %649 = vmatmul.mubr.f32.gmra.mrb[0].mxu0 %v513
        %v650 = vpop.f32.mrb[0].mxu0
        %v651 = vadd.f32 0.0, %v650
        %v652 = vpop.f32.mrb[0].mxu0
        %653 = vmatprep.mubr.f32.mxu0 0.0
        %654 = vmatmul.mubr.f32.gmra.mrb[0].mxu0 %v516
        %v655 = vpop.f32.mrb[0].mxu0
        %v656 = vadd.f32 0.0, %v655
        %v657 = vpop.f32.mrb[0].mxu0
        %658 = vmatprep.mubr.f32.mxu0 0.0
        %659 = vmatmul.mubr.f32.gmra.mrb[0].mxu0 %v519
        %v660 = vpop.f32.mrb[0].mxu0
        %v661 = vadd.f32 0.0, %v660
        %v662 = vpop.f32.mrb[0].mxu0
        %663 = vmatprep.mubr.f32.mxu0 0.0
        %664 = vmatmul.mubr.f32.gmra.mrb[0].mxu0 %v522
        %v665 = vpop.f32.mrb[0].mxu0
        %v666 = vadd.f32 0.0, %v665
        %v667 = vpop.f32.mrb[0].mxu0
        %668 = vmatprep.mubr.f32.mxu0 0.0
        %669 = vmatmul.mubr.f32.gmra.mrb[0].mxu0 %v525
        %v670 = vpop.f32.mrb[0].mxu0
        %v671 = vadd.f32 0.0, %v670
        %v672 = vpop.f32.mrb[0].mxu0
        %673 = vmatprep.mubr.f32.mxu0 0.0
        %674 = vmatmul.mubr.f32.gmra.mrb[0].mxu0 %v528
        %v675 = vpop.f32.mrb[0].mxu0
        %v676 = vadd.f32 0.0, %v675
        %v677 = vpop.f32.mrb[0].mxu0
        %678 = vmatprep.mubr.f32.mxu0 0.0
        %679 = vmatmul.mubr.f32.gmra.mrb[0].mxu0 %v531
        %v680 = vpop.f32.mrb[0].mxu0
        %v681 = vadd.f32 0.0, %v680
        %v682 = vpop.f32.mrb[0].mxu0
        %683 = vmatprep.mubr.f32.mxu0 0.0
        %684 = vmatmul.mubr.f32.gmra.mrb[0].mxu0 %v534
        %v685 = vpop.f32.mrb[0].mxu0
        %v686 = vadd.f32 0.0, %v685
        %v687 = vpop.f32.mrb[0].mxu0
        %688 = vdwg.mxu0
        %v689 = vld [vmem:[#allocation2] sm:$0xff]
        %v690 = vld [vmem:[#allocation2 + $0x8] sm:$0xff]
        %v691 = vld [vmem:[#allocation2 + $0x10] sm:$0xff]
        %v692 = vld [vmem:[#allocation2 + $0x18] sm:$0xff]
        %v693 = vld [vmem:[#allocation2 + $0x20] sm:$0xff]
        %v694 = vld [vmem:[#allocation2 + $0x28] sm:$0xff]
        %v695 = vld [vmem:[#allocation2 + $0x30] sm:$0xff]
        %v696 = vld [vmem:[#allocation2 + $0x38] sm:$0xff]
        %v697 = vadd.f32 %v689, %v651
        %v698 = vadd.f32 %v690, %v656
        %v699 = vadd.f32 %v691, %v661
        %v700 = vadd.f32 %v692, %v666
        %v701 = vadd.f32 %v693, %v671
        %v702 = vadd.f32 %v694, %v676
        %v703 = vadd.f32 %v695, %v681
        %v704 = vadd.f32 %v696, %v686
        %705 = vst [vmem:[#allocation2] sm:$0xff] %v697
        %706 = vst [vmem:[#allocation2 + $0x8] sm:$0xff] %v698
        %707 = vst [vmem:[#allocation2 + $0x10] sm:$0xff] %v699
        %708 = vst [vmem:[#allocation2 + $0x18] sm:$0xff] %v700
        %709 = vst [vmem:[#allocation2 + $0x20] sm:$0xff] %v701
        %710 = vst [vmem:[#allocation2 + $0x28] sm:$0xff] %v702
        %711 = vst [vmem:[#allocation2 + $0x30] sm:$0xff] %v703
        %712 = vst [vmem:[#allocation2 + $0x38] sm:$0xff] %v704
        %v713 = vld [vmem:[#allocation3] sm:$0xff]
        %v714 = vld [vmem:[#allocation3 + $0x8] sm:$0xff]
        %v715 = vld [vmem:[#allocation3 + $0x10] sm:$0xff]
        %v716 = vld [vmem:[#allocation3 + $0x18] sm:$0xff]
        %v717 = vld [vmem:[#allocation3 + $0x20] sm:$0xff]
        %v718 = vld [vmem:[#allocation3 + $0x28] sm:$0xff]
        %v719 = vld [vmem:[#allocation3 + $0x30] sm:$0xff]
        %v720 = vld [vmem:[#allocation3 + $0x38] sm:$0xff]
        %v721 = vsel %vm275, %v496, 0.0
        %722 = vadd.xlane.f32.xlu0 %v721
        %v723 = vpop.xlane.xlu0 %722
        %v724 = vsel %vm275, %v497, 0.0
        %725 = vadd.xlane.f32.xlu0 %v724
        %v726 = vpop.xlane.xlu0 %725
        %v727 = vsel %vm275, %v498, 0.0
        %728 = vadd.xlane.f32.xlu0 %v727
        %v729 = vpop.xlane.xlu0 %728
        %v730 = vsel %vm275, %v499, 0.0
        %731 = vadd.xlane.f32.xlu0 %v730
        %v732 = vpop.xlane.xlu0 %731
        %v733 = vsel %vm275, %v500, 0.0
        %734 = vadd.xlane.f32.xlu0 %v733
        %v735 = vpop.xlane.xlu0 %734
        %v736 = vsel %vm275, %v501, 0.0
        %737 = vadd.xlane.f32.xlu0 %v736
        %v738 = vpop.xlane.xlu0 %737
        %v739 = vsel %vm275, %v502, 0.0
        %740 = vadd.xlane.f32.xlu0 %v739
        %v741 = vpop.xlane.xlu0 %740
        %v742 = vsel %vm275, %v503, 0.0
        %743 = vadd.xlane.f32.xlu0 %v742
        %v744 = vpop.xlane.xlu0 %743
        %v745 = vadd.f32 %v713, %v723
        %v746 = vadd.f32 %v714, %v726
        %v747 = vadd.f32 %v715, %v729
        %v748 = vadd.f32 %v716, %v732
        %v749 = vadd.f32 %v717, %v735
        %v750 = vadd.f32 %v718, %v738
        %v751 = vadd.f32 %v719, %v741
        %v752 = vadd.f32 %v720, %v744
        %vm753 = vcmask 7168
        %754 = vst.msk [vmem:[#allocation3] sm:$0xff] %vm753, %v745
        %755 = vst.msk [vmem:[#allocation3 + $0x8] sm:$0xff] %vm753, %v746
        %756 = vst.msk [vmem:[#allocation3 + $0x10] sm:$0xff] %vm753, %v747
        %757 = vst.msk [vmem:[#allocation3 + $0x18] sm:$0xff] %vm753, %v748
        %758 = vst.msk [vmem:[#allocation3 + $0x20] sm:$0xff] %vm753, %v749
        %759 = vst.msk [vmem:[#allocation3 + $0x28] sm:$0xff] %vm753, %v750
        %760 = vst.msk [vmem:[#allocation3 + $0x30] sm:$0xff] %vm753, %v751
        %761 = vst.msk [vmem:[#allocation3 + $0x38] sm:$0xff] %vm753, %v752
        %s762 = scalar_lea.vmem %s195, 128
        %v763 = vld [vmem:[%s762] sm:$0xff]
        %v764 = vld [vmem:[%s762 + $0x8] sm:$0xff]
        %v765 = vld [vmem:[%s762 + $0x10] sm:$0xff]
        %v766 = vld [vmem:[%s762 + $0x18] sm:$0xff]
        %v767 = vld [vmem:[%s762 + $0x20] sm:$0xff]
        %v768 = vld [vmem:[%s762 + $0x28] sm:$0xff]
        %v769 = vld [vmem:[%s762 + $0x30] sm:$0xff]
        %v770 = vld [vmem:[%s762 + $0x38] sm:$0xff]
        %v771 = vld [vmem:[%s762 + $0x40] sm:$0xff]
        %v772 = vld [vmem:[%s762 + $0x48] sm:$0xff]
        %v773 = vld [vmem:[%s762 + $0x50] sm:$0xff]
        %v774 = vld [vmem:[%s762 + $0x58] sm:$0xff]
        %v775 = vld [vmem:[%s762 + $0x60] sm:$0xff]
        %v776 = vld [vmem:[%s762 + $0x68] sm:$0xff]
        %v777 = vld [vmem:[%s762 + $0x70] sm:$0xff]
        %v778 = vld [vmem:[%s762 + $0x78] sm:$0xff]
        %v779 = vmul.f32 %v763, %v763
        %v780 = vmul.f32 %v764, %v764
        %v781 = vmul.f32 %v765, %v765
        %v782 = vmul.f32 %v766, %v766
        %v783 = vmul.f32 %v767, %v767
        %v784 = vmul.f32 %v768, %v768
        %v785 = vmul.f32 %v769, %v769
        %v786 = vmul.f32 %v770, %v770
        %v787 = vmul.f32 %v771, %v771
        %v788 = vmul.f32 %v772, %v772
        %v789 = vmul.f32 %v773, %v773
        %v790 = vmul.f32 %v774, %v774
        %v791 = vmul.f32 %v775, %v775
        %v792 = vmul.f32 %v776, %v776
        %v793 = vmul.f32 %v777, %v777
        %v794 = vmul.f32 %v778, %v778
        %v795 = vsel %vm275, %v779, 0.0
        %v796 = vsel %vm275, %v780, 0.0
        %v797 = vadd.f32 %v795, %v796
        %v798 = vsel %vm275, %v781, 0.0
        %v799 = vadd.f32 %v797, %v798
        %v800 = vsel %vm275, %v782, 0.0
        %v801 = vadd.f32 %v799, %v800
        %v802 = vsel %vm275, %v783, 0.0
        %v803 = vadd.f32 %v801, %v802
        %v804 = vsel %vm275, %v784, 0.0
        %v805 = vadd.f32 %v803, %v804
        %v806 = vsel %vm275, %v785, 0.0
        %v807 = vadd.f32 %v805, %v806
        %v808 = vsel %vm275, %v786, 0.0
        %v809 = vadd.f32 %v807, %v808
        %v810 = vsel %vm275, %v787, 0.0
        %v811 = vadd.f32 %v809, %v810
        %v812 = vsel %vm275, %v788, 0.0
        %v813 = vadd.f32 %v811, %v812
        %v814 = vsel %vm275, %v789, 0.0
        %v815 = vadd.f32 %v813, %v814
        %v816 = vsel %vm275, %v790, 0.0
        %v817 = vadd.f32 %v815, %v816
        %v818 = vsel %vm275, %v791, 0.0
        %v819 = vadd.f32 %v817, %v818
        %v820 = vsel %vm275, %v792, 0.0
        %v821 = vadd.f32 %v819, %v820
        %v822 = vsel %vm275, %v793, 0.0
        %v823 = vadd.f32 %v821, %v822
        %v824 = vsel %vm275, %v794, 0.0
        %v825 = vadd.f32 %v823, %v824
        %v826 = vrot.slane %v825, 4
        %v827 = vadd.f32 %v825, %v826
        %v828 = vrot.slane %v827, 2
        %v829 = vadd.f32 %v827, %v828
        %v830 = vrot.slane %v829, 1
        %v831 = vadd.f32 %v829, %v830
        %v832 = vmax.f32 %v831, 1e-24
        %v833 = vrsqrt.pop %v832
        %834 = vmatprep.subr.mxu0 0.0
        %835 = vmatpush1.msra.mxu0 %v763
        %836 = vmatprep.subr.mxu0 0.0
        %837 = vmatpush1.msra.mxu0 %v764
        %838 = vmatprep.subr.mxu0 0.0
        %839 = vmatpush1.msra.mxu0 %v765
        %840 = vmatprep.subr.mxu0 0.0
        %841 = vmatpush1.msra.mxu0 %v766
        %842 = vmatprep.subr.mxu0 0.0
        %843 = vmatpush1.msra.mxu0 %v767
        %844 = vmatprep.subr.mxu0 0.0
        %845 = vmatpush1.msra.mxu0 %v768
        %846 = vmatprep.subr.mxu0 0.0
        %847 = vmatpush1.msra.mxu0 %v769
        %848 = vmatprep.subr.mxu0 0.0
        %849 = vmatpush1.msra.mxu0 %v770
        %850 = vmatprep.subr.mxu0 0.0
        %851 = vmatpush1.msra.mxu0 %v771
        %852 = vmatprep.subr.mxu0 0.0
        %853 = vmatpush1.msra.mxu0 %v772
        %854 = vmatprep.subr.mxu0 0.0
        %855 = vmatpush1.msra.mxu0 %v773
        %856 = vmatprep.subr.mxu0 0.0
        %857 = vmatpush1.msra.mxu0 %v774
        %858 = vmatprep.subr.mxu0 0.0
        %859 = vmatpush1.msra.mxu0 %v775
        %860 = vmatprep.subr.mxu0 0.0
        %861 = vmatpush1.msra.mxu0 %v776
        %862 = vmatprep.subr.mxu0 0.0
        %863 = vmatpush1.msra.mxu0 %v777
        %864 = vmatprep.subr.mxu0 0.0
        %865 = vmatpush1.msra.mxu0 %v778
        %866 = vmatprep.subr.mxu0 0.0
        %867 = vmatpush1.msra.mxu0 0.0
        %868 = vmatprep.subr.mxu0 0.0
        %869 = vmatpush1.msra.mxu0 0.0
        %870 = vmatprep.subr.mxu0 0.0
        %871 = vmatpush1.msra.mxu0 0.0
        %872 = vmatprep.subr.mxu0 0.0
        %873 = vmatpush1.msra.mxu0 0.0
        %874 = vmatprep.subr.mxu0 0.0
        %875 = vmatpush1.msra.mxu0 0.0
        %876 = vmatprep.subr.mxu0 0.0
        %877 = vmatpush1.msra.mxu0 0.0
        %878 = vmatprep.subr.mxu0 0.0
        %879 = vmatpush1.msra.mxu0 0.0
        %880 = vmatprep.subr.mxu0 0.0
        %881 = vmatpush1.msra.mxu0 0.0
        %882 = vmatprep.subr.mxu0 0.0
        %883 = vmatpush1.msra.mxu0 0.0
        %884 = vmatprep.subr.mxu0 0.0
        %885 = vmatpush1.msra.mxu0 0.0
        %886 = vmatprep.subr.mxu0 0.0
        %887 = vmatpush1.msra.mxu0 0.0
        %888 = vmatprep.subr.mxu0 0.0
        %889 = vmatpush1.msra.mxu0 0.0
        %890 = vmatprep.subr.mxu0 0.0
        %891 = vmatpush1.msra.mxu0 0.0
        %892 = vmatprep.subr.mxu0 0.0
        %893 = vmatpush1.msra.mxu0 0.0
        %894 = vmatprep.subr.mxu0 0.0
        %895 = vmatpush1.msra.mxu0 0.0
        %896 = vmatprep.subr.mxu0 0.0
        %897 = vmatpush1.msra.mxu0 0.0
        %898 = vmatprep.mubr.f32.mxu0 0.0
        %899 = vmatmul.mubr.f32.gmra.mrb[0].mxu0 %v235
        %v900 = vpop.f32.mrb[0].mxu0
        %v901 = vadd.f32 0.0, %v900
        %v902 = vpop.f32.mrb[0].mxu0
        %903 = vmatprep.mubr.f32.mxu0 0.0
        %904 = vmatmul.mubr.f32.gmra.mrb[0].mxu0 %v236
        %v905 = vpop.f32.mrb[0].mxu0
        %v906 = vadd.f32 0.0, %v905
        %v907 = vpop.f32.mrb[0].mxu0
        %908 = vmatprep.mubr.f32.mxu0 0.0
        %909 = vmatmul.mubr.f32.gmra.mrb[0].mxu0 %v237
        %v910 = vpop.f32.mrb[0].mxu0
        %v911 = vadd.f32 0.0, %v910
        %v912 = vpop.f32.mrb[0].mxu0
        %913 = vmatprep.mubr.f32.mxu0 0.0
        %914 = vmatmul.mubr.f32.gmra.mrb[0].mxu0 %v238
        %v915 = vpop.f32.mrb[0].mxu0
        %v916 = vadd.f32 0.0, %v915
        %v917 = vpop.f32.mrb[0].mxu0
        %918 = vmatprep.mubr.f32.mxu0 0.0
        %919 = vmatmul.mubr.f32.gmra.mrb[0].mxu0 %v239
        %v920 = vpop.f32.mrb[0].mxu0
        %v921 = vadd.f32 0.0, %v920
        %v922 = vpop.f32.mrb[0].mxu0
        %923 = vmatprep.mubr.f32.mxu0 0.0
        %924 = vmatmul.mubr.f32.gmra.mrb[0].mxu0 %v240
        %v925 = vpop.f32.mrb[0].mxu0
        %v926 = vadd.f32 0.0, %v925
        %v927 = vpop.f32.mrb[0].mxu0
        %928 = vmatprep.mubr.f32.mxu0 0.0
        %929 = vmatmul.mubr.f32.gmra.mrb[0].mxu0 %v241
        %v930 = vpop.f32.mrb[0].mxu0
        %v931 = vadd.f32 0.0, %v930
        %v932 = vpop.f32.mrb[0].mxu0
        %933 = vmatprep.mubr.f32.mxu0 0.0
        %934 = vmatmul.mubr.f32.gmra.mrb[0].mxu0 %v242
        %v935 = vpop.f32.mrb[0].mxu0
        %v936 = vadd.f32 0.0, %v935
        %v937 = vpop.f32.mrb[0].mxu0
        %938 = vdwg.mxu0
        %v939 = vmul.f32 %v901, %v833
        %v940 = vmul.f32 %v906, %v833
        %v941 = vmul.f32 %v911, %v833
        %v942 = vmul.f32 %v916, %v833
        %v943 = vmul.f32 %v921, %v833
        %v944 = vmul.f32 %v926, %v833
        %v945 = vmul.f32 %v931, %v833
        %v946 = vmul.f32 %v936, %v833
        %v947 = vsel %vm275, %v939, -inf
        %v948 = vsel %vm275, %v940, -inf
        %v949 = vsel %vm275, %v941, -inf
        %v950 = vsel %vm275, %v942, -inf
        %v951 = vsel %vm275, %v943, -inf
        %v952 = vmax.f32 %v947, %v951
        %v953 = vsel %vm275, %v944, -inf
        %v954 = vmax.f32 %v948, %v953
        %v955 = vsel %vm275, %v945, -inf
        %v956 = vmax.f32 %v949, %v955
        %v957 = vsel %vm275, %v946, -inf
        %v958 = vmax.f32 %v950, %v957
        %v959 = vmax.f32 %v952, %v954
        %v960 = vmax.f32 %v956, %v958
        %v961 = vmax.f32 %v959, %v960
        %v962 = vrot.slane %v961, 4
        %v963 = vmax.f32 %v961, %v962
        %v964 = vrot.slane %v963, 2
        %v965 = vmax.f32 %v963, %v964
        %v966 = vrot.slane %v965, 1
        %v967 = vmax.f32 %v965, %v966
        %v968 = vsub.f32 %v939, %v967
        %v969 = vsub.f32 %v940, %v967
        %v970 = vsub.f32 %v941, %v967
        %v971 = vsub.f32 %v942, %v967
        %v972 = vsub.f32 %v943, %v967
        %v973 = vsub.f32 %v944, %v967
        %v974 = vsub.f32 %v945, %v967
        %v975 = vsub.f32 %v946, %v967
        %v976 = vmul.f32 %v968, 1.442695
        %v977 = vpow.pop %v976
        %v978 = vmul.f32 %v969, 1.442695
        %v979 = vpow.pop %v978
        %v980 = vmul.f32 %v970, 1.442695
        %v981 = vpow.pop %v980
        %v982 = vmul.f32 %v971, 1.442695
        %v983 = vpow.pop %v982
        %v984 = vmul.f32 %v972, 1.442695
        %v985 = vpow.pop %v984
        %v986 = vmul.f32 %v973, 1.442695
        %v987 = vpow.pop %v986
        %v988 = vmul.f32 %v974, 1.442695
        %v989 = vpow.pop %v988
        %v990 = vmul.f32 %v975, 1.442695
        %v991 = vpow.pop %v990
        %v992 = vsel %vm275, %v977, 0.0
        %v993 = vsel %vm275, %v979, 0.0
        %v994 = vadd.f32 %v992, %v993
        %v995 = vsel %vm275, %v981, 0.0
        %v996 = vadd.f32 %v994, %v995
        %v997 = vsel %vm275, %v983, 0.0
        %v998 = vadd.f32 %v996, %v997
        %v999 = vsel %vm275, %v985, 0.0
        %v1000 = vadd.f32 %v998, %v999
        %v1001 = vsel %vm275, %v987, 0.0
        %v1002 = vadd.f32 %v1000, %v1001
        %v1003 = vsel %vm275, %v989, 0.0
        %v1004 = vadd.f32 %v1002, %v1003
        %v1005 = vsel %vm275, %v991, 0.0
        %v1006 = vadd.f32 %v1004, %v1005
        %v1007 = vrot.slane %v1006, 4
        %v1008 = vadd.f32 %v1006, %v1007
        %v1009 = vrot.slane %v1008, 2
        %v1010 = vadd.f32 %v1008, %v1009
        %v1011 = vrot.slane %v1010, 1
        %v1012 = vadd.f32 %v1010, %v1011
        %v1013 = vrcp.pop %v1012
        %v1014 = vmul.f32 1.0, %v1013
        %v1015 = vmul.f32 %v977, %v1014
        %v1016 = vmul.f32 %v979, %v1014
        %v1017 = vmul.f32 %v981, %v1014
        %v1018 = vmul.f32 %v983, %v1014
        %v1019 = vmul.f32 %v985, %v1014
        %v1020 = vmul.f32 %v987, %v1014
        %v1021 = vmul.f32 %v989, %v1014
        %v1022 = vmul.f32 %v991, %v1014
        %v1023 = vmul.f32 %v1015, %v833
        %v1024 = vmul.f32 %v1016, %v833
        %v1025 = vmul.f32 %v1017, %v833
        %v1026 = vmul.f32 %v1018, %v833
        %v1027 = vmul.f32 %v1019, %v833
        %v1028 = vmul.f32 %v1020, %v833
        %v1029 = vmul.f32 %v1021, %v833
        %v1030 = vmul.f32 %v1022, %v833
        %v1032 = vsel %vm275, %v1023, 0
        %v1035 = vsel %vm275, %v1024, 0
        %v1038 = vsel %vm275, %v1025, 0
        %v1041 = vsel %vm275, %v1026, 0
        %v1044 = vsel %vm275, %v1027, 0
        %v1047 = vsel %vm275, %v1028, 0
        %v1050 = vsel %vm275, %v1029, 0
        %v1053 = vsel %vm275, %v1030, 0
        %v1056 = vsel %vm275, %v763, 0
        %v1059 = vsel %vm275, %v764, 0
        %v1062 = vsel %vm275, %v765, 0
        %v1065 = vsel %vm275, %v766, 0
        %v1068 = vsel %vm275, %v767, 0
        %v1071 = vsel %vm275, %v768, 0
        %v1074 = vsel %vm275, %v769, 0
        %v1077 = vsel %vm275, %v770, 0
        %v1080 = vsel %vm275, %v771, 0
        %v1083 = vsel %vm275, %v772, 0
        %v1086 = vsel %vm275, %v773, 0
        %v1089 = vsel %vm275, %v774, 0
        %v1092 = vsel %vm275, %v775, 0
        %v1095 = vsel %vm275, %v776, 0
        %v1098 = vsel %vm275, %v777, 0
        %v1101 = vsel %vm275, %v778, 0
        %1103 = vmatprep.subr.mxu0 0.0
        %1104 = vmatpush1.xpose.msra.mxu0 %v1056
        %1105 = vmatprep.subr.mxu0 0.0
        %1106 = vmatpush1.xpose.msra.mxu0 %v1059
        %1107 = vmatprep.subr.mxu0 0.0
        %1108 = vmatpush1.xpose.msra.mxu0 %v1062
        %1109 = vmatprep.subr.mxu0 0.0
        %1110 = vmatpush1.xpose.msra.mxu0 %v1065
        %1111 = vmatprep.subr.mxu0 0.0
        %1112 = vmatpush1.xpose.msra.mxu0 %v1068
        %1113 = vmatprep.subr.mxu0 0.0
        %1114 = vmatpush1.xpose.msra.mxu0 %v1071
        %1115 = vmatprep.subr.mxu0 0.0
        %1116 = vmatpush1.xpose.msra.mxu0 %v1074
        %1117 = vmatprep.subr.mxu0 0.0
        %1118 = vmatpush1.xpose.msra.mxu0 %v1077
        %1119 = vmatprep.subr.mxu0 0.0
        %1120 = vmatpush1.xpose.msra.mxu0 %v1080
        %1121 = vmatprep.subr.mxu0 0.0
        %1122 = vmatpush1.xpose.msra.mxu0 %v1083
        %1123 = vmatprep.subr.mxu0 0.0
        %1124 = vmatpush1.xpose.msra.mxu0 %v1086
        %1125 = vmatprep.subr.mxu0 0.0
        %1126 = vmatpush1.xpose.msra.mxu0 %v1089
        %1127 = vmatprep.subr.mxu0 0.0
        %1128 = vmatpush1.xpose.msra.mxu0 %v1092
        %1129 = vmatprep.subr.mxu0 0.0
        %1130 = vmatpush1.xpose.msra.mxu0 %v1095
        %1131 = vmatprep.subr.mxu0 0.0
        %1132 = vmatpush1.xpose.msra.mxu0 %v1098
        %1133 = vmatprep.subr.mxu0 0.0
        %1134 = vmatpush1.xpose.msra.mxu0 %v1101
        %1135 = vmatprep.subr.mxu0 0.0
        %1136 = vmatpush1.xpose.msra.mxu0 0.0
        %1137 = vmatprep.subr.mxu0 0.0
        %1138 = vmatpush1.xpose.msra.mxu0 0.0
        %1139 = vmatprep.subr.mxu0 0.0
        %1140 = vmatpush1.xpose.msra.mxu0 0.0
        %1141 = vmatprep.subr.mxu0 0.0
        %1142 = vmatpush1.xpose.msra.mxu0 0.0
        %1143 = vmatprep.subr.mxu0 0.0
        %1144 = vmatpush1.xpose.msra.mxu0 0.0
        %1145 = vmatprep.subr.mxu0 0.0
        %1146 = vmatpush1.xpose.msra.mxu0 0.0
        %1147 = vmatprep.subr.mxu0 0.0
        %1148 = vmatpush1.xpose.msra.mxu0 0.0
        %1149 = vmatprep.subr.mxu0 0.0
        %1150 = vmatpush1.xpose.msra.mxu0 0.0
        %1151 = vmatprep.subr.mxu0 0.0
        %1152 = vmatpush1.xpose.msra.mxu0 0.0
        %1153 = vmatprep.subr.mxu0 0.0
        %1154 = vmatpush1.xpose.msra.mxu0 0.0
        %1155 = vmatprep.subr.mxu0 0.0
        %1156 = vmatpush1.xpose.msra.mxu0 0.0
        %1157 = vmatprep.subr.mxu0 0.0
        %1158 = vmatpush1.xpose.msra.mxu0 0.0
        %1159 = vmatprep.subr.mxu0 0.0
        %1160 = vmatpush1.xpose.msra.mxu0 0.0
        %1161 = vmatprep.subr.mxu0 0.0
        %1162 = vmatpush1.xpose.msra.mxu0 0.0
        %1163 = vmatprep.subr.mxu0 0.0
        %1164 = vmatpush1.xpose.msra.mxu0 0.0
        %1165 = vmatprep.subr.mxu0 0.0
        %1166 = vmatpush1.xpose.msra.mxu0 0.0
        %1167 = vmatprep.mubr.f32.mxu0 0.0
        %1168 = vmatmul.mubr.f32.gmra.mrb[0].mxu0 %v1032
        %v1169 = vpop.f32.mrb[0].mxu0
        %v1170 = vadd.f32 0.0, %v1169
        %v1171 = vpop.f32.mrb[0].mxu0
        %1172 = vmatprep.mubr.f32.mxu0 0.0
        %1173 = vmatmul.mubr.f32.gmra.mrb[0].mxu0 %v1035
        %v1174 = vpop.f32.mrb[0].mxu0
        %v1175 = vadd.f32 0.0, %v1174
        %v1176 = vpop.f32.mrb[0].mxu0
        %1177 = vmatprep.mubr.f32.mxu0 0.0
        %1178 = vmatmul.mubr.f32.gmra.mrb[0].mxu0 %v1038
        %v1179 = vpop.f32.mrb[0].mxu0
        %v1180 = vadd.f32 0.0, %v1179
        %v1181 = vpop.f32.mrb[0].mxu0
        %1182 = vmatprep.mubr.f32.mxu0 0.0
        %1183 = vmatmul.mubr.f32.gmra.mrb[0].mxu0 %v1041
        %v1184 = vpop.f32.mrb[0].mxu0
        %v1185 = vadd.f32 0.0, %v1184
        %v1186 = vpop.f32.mrb[0].mxu0
        %1187 = vmatprep.mubr.f32.mxu0 0.0
        %1188 = vmatmul.mubr.f32.gmra.mrb[0].mxu0 %v1044
        %v1189 = vpop.f32.mrb[0].mxu0
        %v1190 = vadd.f32 0.0, %v1189
        %v1191 = vpop.f32.mrb[0].mxu0
        %1192 = vmatprep.mubr.f32.mxu0 0.0
        %1193 = vmatmul.mubr.f32.gmra.mrb[0].mxu0 %v1047
        %v1194 = vpop.f32.mrb[0].mxu0
        %v1195 = vadd.f32 0.0, %v1194
        %v1196 = vpop.f32.mrb[0].mxu0
        %1197 = vmatprep.mubr.f32.mxu0 0.0
        %1198 = vmatmul.mubr.f32.gmra.mrb[0].mxu0 %v1050
        %v1199 = vpop.f32.mrb[0].mxu0
        %v1200 = vadd.f32 0.0, %v1199
        %v1201 = vpop.f32.mrb[0].mxu0
        %1202 = vmatprep.mubr.f32.mxu0 0.0
        %1203 = vmatmul.mubr.f32.gmra.mrb[0].mxu0 %v1053
        %v1204 = vpop.f32.mrb[0].mxu0
        %v1205 = vadd.f32 0.0, %v1204
        %v1206 = vpop.f32.mrb[0].mxu0
        %1207 = vdwg.mxu0
        %s1208 = scalar_lea.vmem [#allocation2], 64
        %v1209 = vld [vmem:[%s1208] sm:$0xff]
        %v1210 = vld [vmem:[%s1208 + $0x8] sm:$0xff]
        %v1211 = vld [vmem:[%s1208 + $0x10] sm:$0xff]
        %v1212 = vld [vmem:[%s1208 + $0x18] sm:$0xff]
        %v1213 = vld [vmem:[%s1208 + $0x20] sm:$0xff]
        %v1214 = vld [vmem:[%s1208 + $0x28] sm:$0xff]
        %v1215 = vld [vmem:[%s1208 + $0x30] sm:$0xff]
        %v1216 = vld [vmem:[%s1208 + $0x38] sm:$0xff]
        %v1217 = vadd.f32 %v1209, %v1170
        %v1218 = vadd.f32 %v1210, %v1175
        %v1219 = vadd.f32 %v1211, %v1180
        %v1220 = vadd.f32 %v1212, %v1185
        %v1221 = vadd.f32 %v1213, %v1190
        %v1222 = vadd.f32 %v1214, %v1195
        %v1223 = vadd.f32 %v1215, %v1200
        %v1224 = vadd.f32 %v1216, %v1205
        %1225 = vst [vmem:[%s1208] sm:$0xff] %v1217
        %1226 = vst [vmem:[%s1208 + $0x8] sm:$0xff] %v1218
        %1227 = vst [vmem:[%s1208 + $0x10] sm:$0xff] %v1219
        %1228 = vst [vmem:[%s1208 + $0x18] sm:$0xff] %v1220
        %1229 = vst [vmem:[%s1208 + $0x20] sm:$0xff] %v1221
        %1230 = vst [vmem:[%s1208 + $0x28] sm:$0xff] %v1222
        %1231 = vst [vmem:[%s1208 + $0x30] sm:$0xff] %v1223
        %1232 = vst [vmem:[%s1208 + $0x38] sm:$0xff] %v1224
        %s1233 = scalar_lea.vmem [#allocation3], 64
        %v1234 = vld [vmem:[%s1233] sm:$0xff]
        %v1235 = vld [vmem:[%s1233 + $0x8] sm:$0xff]
        %v1236 = vld [vmem:[%s1233 + $0x10] sm:$0xff]
        %v1237 = vld [vmem:[%s1233 + $0x18] sm:$0xff]
        %v1238 = vld [vmem:[%s1233 + $0x20] sm:$0xff]
        %v1239 = vld [vmem:[%s1233 + $0x28] sm:$0xff]
        %v1240 = vld [vmem:[%s1233 + $0x30] sm:$0xff]
        %v1241 = vld [vmem:[%s1233 + $0x38] sm:$0xff]
        %v1242 = vsel %vm275, %v1015, 0.0
        %1243 = vadd.xlane.f32.xlu0 %v1242
        %v1244 = vpop.xlane.xlu0 %1243
        %v1245 = vsel %vm275, %v1016, 0.0
        %1246 = vadd.xlane.f32.xlu0 %v1245
        %v1247 = vpop.xlane.xlu0 %1246
        %v1248 = vsel %vm275, %v1017, 0.0
        %1249 = vadd.xlane.f32.xlu0 %v1248
        %v1250 = vpop.xlane.xlu0 %1249
        %v1251 = vsel %vm275, %v1018, 0.0
        %1252 = vadd.xlane.f32.xlu0 %v1251
        %v1253 = vpop.xlane.xlu0 %1252
        %v1254 = vsel %vm275, %v1019, 0.0
        %1255 = vadd.xlane.f32.xlu0 %v1254
        %v1256 = vpop.xlane.xlu0 %1255
        %v1257 = vsel %vm275, %v1020, 0.0
        %1258 = vadd.xlane.f32.xlu0 %v1257
        %v1259 = vpop.xlane.xlu0 %1258
        %v1260 = vsel %vm275, %v1021, 0.0
        %1261 = vadd.xlane.f32.xlu0 %v1260
        %v1262 = vpop.xlane.xlu0 %1261
        %v1263 = vsel %vm275, %v1022, 0.0
        %1264 = vadd.xlane.f32.xlu0 %v1263
        %v1265 = vpop.xlane.xlu0 %1264
        %v1266 = vadd.f32 %v1234, %v1244
        %v1267 = vadd.f32 %v1235, %v1247
        %v1268 = vadd.f32 %v1236, %v1250
        %v1269 = vadd.f32 %v1237, %v1253
        %v1270 = vadd.f32 %v1238, %v1256
        %v1271 = vadd.f32 %v1239, %v1259
        %v1272 = vadd.f32 %v1240, %v1262
        %v1273 = vadd.f32 %v1241, %v1265
        %1274 = vst.msk [vmem:[%s1233] sm:$0xff] %vm753, %v1266
        %1275 = vst.msk [vmem:[%s1233 + $0x8] sm:$0xff] %vm753, %v1267
        %1276 = vst.msk [vmem:[%s1233 + $0x10] sm:$0xff] %vm753, %v1268
        %1277 = vst.msk [vmem:[%s1233 + $0x18] sm:$0xff] %vm753, %v1269
        %1278 = vst.msk [vmem:[%s1233 + $0x20] sm:$0xff] %vm753, %v1270
        %1279 = vst.msk [vmem:[%s1233 + $0x28] sm:$0xff] %vm753, %v1271
        %1280 = vst.msk [vmem:[%s1233 + $0x30] sm:$0xff] %vm753, %v1272
        %1281 = vst.msk [vmem:[%s1233 + $0x38] sm:$0xff] %vm753, %v1273
        // Predicated region
        $region37: #{tpu_custom_call.1} parent=31 // pred_check
          %p1282 = pneg %p198
        $region38: #{tpu_custom_call.1} parent=31 // pred_check_branch
          %1284 = sbr.rel (%p1282) target = $region40
        $region39: #{tpu_custom_call.1} parent=31 // pred_region
          %v1285 = vld [vmem:[#allocation2] sm:$0xff]
          %v1286 = vld [vmem:[#allocation2 + $0x8] sm:$0xff]
          %v1287 = vld [vmem:[#allocation2 + $0x10] sm:$0xff]
          %v1288 = vld [vmem:[#allocation2 + $0x18] sm:$0xff]
          %v1289 = vld [vmem:[#allocation2 + $0x20] sm:$0xff]
          %v1290 = vld [vmem:[#allocation2 + $0x28] sm:$0xff]
          %v1291 = vld [vmem:[#allocation2 + $0x30] sm:$0xff]
          %v1292 = vld [vmem:[#allocation2 + $0x38] sm:$0xff]
          %v1293 = vld [vmem:[#allocation2 + $0x40] sm:$0xff]
          %v1294 = vld [vmem:[#allocation2 + $0x48] sm:$0xff]
          %v1295 = vld [vmem:[#allocation2 + $0x50] sm:$0xff]
          %v1296 = vld [vmem:[#allocation2 + $0x58] sm:$0xff]
          %v1297 = vld [vmem:[#allocation2 + $0x60] sm:$0xff]
          %v1298 = vld [vmem:[#allocation2 + $0x68] sm:$0xff]
          %v1299 = vld [vmem:[#allocation2 + $0x70] sm:$0xff]
          %v1300 = vld [vmem:[#allocation2 + $0x78] sm:$0xff]
          %v1301 = vld [vmem:[%s2] sm:$0xff]
          %v1302 = vld [vmem:[%s2 + $0x8] sm:$0xff]
          %v1303 = vld [vmem:[%s2 + $0x10] sm:$0xff]
          %v1304 = vld [vmem:[%s2 + $0x18] sm:$0xff]
          %v1305 = vld [vmem:[%s2 + $0x20] sm:$0xff]
          %v1306 = vld [vmem:[%s2 + $0x28] sm:$0xff]
          %v1307 = vld [vmem:[%s2 + $0x30] sm:$0xff]
          %v1308 = vld [vmem:[%s2 + $0x38] sm:$0xff]
          %v1309 = vld [vmem:[#allocation3] sm:$0xff]
          %v1310 = vld [vmem:[#allocation3 + $0x8] sm:$0xff]
          %v1311 = vld [vmem:[#allocation3 + $0x10] sm:$0xff]
          %v1312 = vld [vmem:[#allocation3 + $0x18] sm:$0xff]
          %v1313 = vld [vmem:[#allocation3 + $0x20] sm:$0xff]
          %v1314 = vld [vmem:[#allocation3 + $0x28] sm:$0xff]
          %v1315 = vld [vmem:[#allocation3 + $0x30] sm:$0xff]
          %v1316 = vld [vmem:[#allocation3 + $0x38] sm:$0xff]
          %v1317 = vld [vmem:[#allocation3 + $0x40] sm:$0xff]
          %v1318 = vld [vmem:[#allocation3 + $0x48] sm:$0xff]
          %v1319 = vld [vmem:[#allocation3 + $0x50] sm:$0xff]
          %v1320 = vld [vmem:[#allocation3 + $0x58] sm:$0xff]
          %v1321 = vld [vmem:[#allocation3 + $0x60] sm:$0xff]
          %v1322 = vld [vmem:[#allocation3 + $0x68] sm:$0xff]
          %v1323 = vld [vmem:[#allocation3 + $0x70] sm:$0xff]
          %v1324 = vld [vmem:[#allocation3 + $0x78] sm:$0xff]
          %1326 = vset.pattern.permute.xlu0 0
          %1327 = vperm.xlu0 %1326, %v1309
          %v1328 = vpop.permute.xlu0 %1327
          %1331 = vset.pattern.permute.xlu0 0
          %1332 = vperm.xlu0 %1331, %v1310
          %v1333 = vpop.permute.xlu0 %1332
          %1336 = vset.pattern.permute.xlu0 0
          %1337 = vperm.xlu0 %1336, %v1311
          %v1338 = vpop.permute.xlu0 %1337
          %1341 = vset.pattern.permute.xlu0 0
          %1342 = vperm.xlu0 %1341, %v1312
          %v1343 = vpop.permute.xlu0 %1342
          %1346 = vset.pattern.permute.xlu0 0
          %1347 = vperm.xlu0 %1346, %v1313
          %v1348 = vpop.permute.xlu0 %1347
          %1351 = vset.pattern.permute.xlu0 0
          %1352 = vperm.xlu0 %1351, %v1314
          %v1353 = vpop.permute.xlu0 %1352
          %1356 = vset.pattern.permute.xlu0 0
          %1357 = vperm.xlu0 %1356, %v1315
          %v1358 = vpop.permute.xlu0 %1357
          %1361 = vset.pattern.permute.xlu0 0
          %1362 = vperm.xlu0 %1361, %v1316
          %v1363 = vpop.permute.xlu0 %1362
          %1366 = vset.pattern.permute.xlu0 0
          %1367 = vperm.xlu0 %1366, %v1317
          %v1368 = vpop.permute.xlu0 %1367
          %1371 = vset.pattern.permute.xlu0 0
          %1372 = vperm.xlu0 %1371, %v1318
          %v1373 = vpop.permute.xlu0 %1372
          %1376 = vset.pattern.permute.xlu0 0
          %1377 = vperm.xlu0 %1376, %v1319
          %v1378 = vpop.permute.xlu0 %1377
          %1381 = vset.pattern.permute.xlu0 0
          %1382 = vperm.xlu0 %1381, %v1320
          %v1383 = vpop.permute.xlu0 %1382
          %1386 = vset.pattern.permute.xlu0 0
          %1387 = vperm.xlu0 %1386, %v1321
          %v1388 = vpop.permute.xlu0 %1387
          %1391 = vset.pattern.permute.xlu0 0
          %1392 = vperm.xlu0 %1391, %v1322
          %v1393 = vpop.permute.xlu0 %1392
          %1396 = vset.pattern.permute.xlu0 0
          %1397 = vperm.xlu0 %1396, %v1323
          %v1398 = vpop.permute.xlu0 %1397
          %1401 = vset.pattern.permute.xlu0 0
          %1402 = vperm.xlu0 %1401, %v1324
          %v1403 = vpop.permute.xlu0 %1402
          %v1405 = vmul.f32 %v1301, %v1328
          %v1406 = vmul.f32 %v1302, %v1333
          %v1407 = vmul.f32 %v1303, %v1338
          %v1408 = vmul.f32 %v1304, %v1343
          %v1409 = vmul.f32 %v1305, %v1348
          %v1410 = vmul.f32 %v1306, %v1353
          %v1411 = vmul.f32 %v1307, %v1358
          %v1412 = vmul.f32 %v1308, %v1363
          %v1413 = vmul.f32 %v1301, %v1368
          %v1414 = vmul.f32 %v1302, %v1373
          %v1415 = vmul.f32 %v1303, %v1378
          %v1416 = vmul.f32 %v1304, %v1383
          %v1417 = vmul.f32 %v1305, %v1388
          %v1418 = vmul.f32 %v1306, %v1393
          %v1419 = vmul.f32 %v1307, %v1398
          %v1420 = vmul.f32 %v1308, %v1403
          %v1421 = vsub.f32 %v1285, %v1405
          %v1422 = vsub.f32 %v1286, %v1406
          %v1423 = vsub.f32 %v1287, %v1407
          %v1424 = vsub.f32 %v1288, %v1408
          %v1425 = vsub.f32 %v1289, %v1409
          %v1426 = vsub.f32 %v1290, %v1410
          %v1427 = vsub.f32 %v1291, %v1411
          %v1428 = vsub.f32 %v1292, %v1412
          %v1429 = vsub.f32 %v1293, %v1413
          %v1430 = vsub.f32 %v1294, %v1414
          %v1431 = vsub.f32 %v1295, %v1415
          %v1432 = vsub.f32 %v1296, %v1416
          %v1433 = vsub.f32 %v1297, %v1417
          %v1434 = vsub.f32 %v1298, %v1418
          %v1435 = vsub.f32 %v1299, %v1419
          %v1436 = vsub.f32 %v1300, %v1420
          %v1437 = vmul.f32 %v1421, %v1421
          %v1438 = vmul.f32 %v1422, %v1422
          %v1439 = vmul.f32 %v1423, %v1423
          %v1440 = vmul.f32 %v1424, %v1424
          %v1441 = vmul.f32 %v1425, %v1425
          %v1442 = vmul.f32 %v1426, %v1426
          %v1443 = vmul.f32 %v1427, %v1427
          %v1444 = vmul.f32 %v1428, %v1428
          %v1445 = vmul.f32 %v1429, %v1429
          %v1446 = vmul.f32 %v1430, %v1430
          %v1447 = vmul.f32 %v1431, %v1431
          %v1448 = vmul.f32 %v1432, %v1432
          %v1449 = vmul.f32 %v1433, %v1433
          %v1450 = vmul.f32 %v1434, %v1434
          %v1451 = vmul.f32 %v1435, %v1435
          %v1452 = vmul.f32 %v1436, %v1436
          %1453 = vadd.xlane.f32.xlu0 %v1437
          %v1454 = vpop.xlane.xlu0 %1453
          %1455 = vadd.xlane.f32.xlu0 %v1438
          %v1456 = vpop.xlane.xlu0 %1455
          %1457 = vadd.xlane.f32.xlu0 %v1439
          %v1458 = vpop.xlane.xlu0 %1457
          %1459 = vadd.xlane.f32.xlu0 %v1440
          %v1460 = vpop.xlane.xlu0 %1459
          %1461 = vadd.xlane.f32.xlu0 %v1441
          %v1462 = vpop.xlane.xlu0 %1461
          %1463 = vadd.xlane.f32.xlu0 %v1442
          %v1464 = vpop.xlane.xlu0 %1463
          %1465 = vadd.xlane.f32.xlu0 %v1443
          %v1466 = vpop.xlane.xlu0 %1465
          %1467 = vadd.xlane.f32.xlu0 %v1444
          %v1468 = vpop.xlane.xlu0 %1467
          %1469 = vadd.xlane.f32.xlu0 %v1445
          %v1470 = vpop.xlane.xlu0 %1469
          %1471 = vadd.xlane.f32.xlu0 %v1446
          %v1472 = vpop.xlane.xlu0 %1471
          %1473 = vadd.xlane.f32.xlu0 %v1447
          %v1474 = vpop.xlane.xlu0 %1473
          %1475 = vadd.xlane.f32.xlu0 %v1448
          %v1476 = vpop.xlane.xlu0 %1475
          %1477 = vadd.xlane.f32.xlu0 %v1449
          %v1478 = vpop.xlane.xlu0 %1477
          %1479 = vadd.xlane.f32.xlu0 %v1450
          %v1480 = vpop.xlane.xlu0 %1479
          %1481 = vadd.xlane.f32.xlu0 %v1451
          %v1482 = vpop.xlane.xlu0 %1481
          %1483 = vadd.xlane.f32.xlu0 %v1452
          %v1484 = vpop.xlane.xlu0 %1483
          %v1485 = vmax.f32 %v1454, 1e-24
          %v1486 = vmax.f32 %v1456, 1e-24
          %v1487 = vmax.f32 %v1458, 1e-24
          %v1488 = vmax.f32 %v1460, 1e-24
          %v1489 = vmax.f32 %v1462, 1e-24
          %v1490 = vmax.f32 %v1464, 1e-24
          %v1491 = vmax.f32 %v1466, 1e-24
          %v1492 = vmax.f32 %v1468, 1e-24
          %v1493 = vmax.f32 %v1470, 1e-24
          %v1494 = vmax.f32 %v1472, 1e-24
          %v1495 = vmax.f32 %v1474, 1e-24
          %v1496 = vmax.f32 %v1476, 1e-24
          %v1497 = vmax.f32 %v1478, 1e-24
          %v1498 = vmax.f32 %v1480, 1e-24
          %v1499 = vmax.f32 %v1482, 1e-24
          %v1500 = vmax.f32 %v1484, 1e-24
          %v1501 = vrsqrt.pop %v1485
          %v1502 = vrsqrt.pop %v1486
          %v1503 = vrsqrt.pop %v1487
          %v1504 = vrsqrt.pop %v1488
          %v1505 = vrsqrt.pop %v1489
          %v1506 = vrsqrt.pop %v1490
          %v1507 = vrsqrt.pop %v1491
          %v1508 = vrsqrt.pop %v1492
          %v1509 = vrsqrt.pop %v1493
          %v1510 = vrsqrt.pop %v1494
          %v1511 = vrsqrt.pop %v1495
          %v1512 = vrsqrt.pop %v1496
          %v1513 = vrsqrt.pop %v1497
          %v1514 = vrsqrt.pop %v1498
          %v1515 = vrsqrt.pop %v1499
          %v1516 = vrsqrt.pop %v1500
          %v1517 = vmul.f32 %v1454, %v1501
          %v1518 = vmul.f32 %v1456, %v1502
          %v1519 = vmul.f32 %v1458, %v1503
          %v1520 = vmul.f32 %v1460, %v1504
          %v1521 = vmul.f32 %v1462, %v1505
          %v1522 = vmul.f32 %v1464, %v1506
          %v1523 = vmul.f32 %v1466, %v1507
          %v1524 = vmul.f32 %v1468, %v1508
          %v1525 = vmul.f32 %v1470, %v1509
          %v1526 = vmul.f32 %v1472, %v1510
          %v1527 = vmul.f32 %v1474, %v1511
          %v1528 = vmul.f32 %v1476, %v1512
          %v1529 = vmul.f32 %v1478, %v1513
          %v1530 = vmul.f32 %v1480, %v1514
          %v1531 = vmul.f32 %v1482, %v1515
          %v1532 = vmul.f32 %v1484, %v1516
          %v1533 = vmul.f32 %v1517, %v1501
          %v1534 = vmul.f32 %v1518, %v1502
          %v1535 = vmul.f32 %v1519, %v1503
          %v1536 = vmul.f32 %v1520, %v1504
          %v1537 = vmul.f32 %v1521, %v1505
          %v1538 = vmul.f32 %v1522, %v1506
          %v1539 = vmul.f32 %v1523, %v1507
          %v1540 = vmul.f32 %v1524, %v1508
          %v1541 = vmul.f32 %v1525, %v1509
          %v1542 = vmul.f32 %v1526, %v1510
          %v1543 = vmul.f32 %v1527, %v1511
          %v1544 = vmul.f32 %v1528, %v1512
          %v1545 = vmul.f32 %v1529, %v1513
          %v1546 = vmul.f32 %v1530, %v1514
          %v1547 = vmul.f32 %v1531, %v1515
          %v1548 = vmul.f32 %v1532, %v1516
          %v1549 = vadd.f32 %v1533, %v1534
          %v1550 = vadd.f32 %v1549, %v1535
          %v1551 = vadd.f32 %v1550, %v1536
          %v1552 = vadd.f32 %v1551, %v1537
          %v1553 = vadd.f32 %v1552, %v1538
          %v1554 = vadd.f32 %v1553, %v1539
          %v1555 = vadd.f32 %v1554, %v1540
          %v1556 = vrot.slane %v1555, 4
          %v1557 = vadd.f32 %v1555, %v1556
          %v1558 = vrot.slane %v1557, 2
          %v1559 = vadd.f32 %v1557, %v1558
          %v1560 = vrot.slane %v1559, 1
          %v1561 = vadd.f32 %v1559, %v1560
          %v1562 = vadd.f32 %v1541, %v1542
          %v1563 = vadd.f32 %v1562, %v1543
          %v1564 = vadd.f32 %v1563, %v1544
          %v1565 = vadd.f32 %v1564, %v1545
          %v1566 = vadd.f32 %v1565, %v1546
          %v1567 = vadd.f32 %v1566, %v1547
          %v1568 = vadd.f32 %v1567, %v1548
          %v1569 = vrot.slane %v1568, 4
          %v1570 = vadd.f32 %v1568, %v1569
          %v1571 = vrot.slane %v1570, 2
          %v1572 = vadd.f32 %v1570, %v1571
          %v1573 = vrot.slane %v1572, 1
          %v1574 = vadd.f32 %v1572, %v1573
          %v1575 = vmax.f32 %v1561, 1e-24
          %v1576 = vmax.f32 %v1574, 1e-24
          %v1577 = vrsqrt.pop %v1575
          %v1578 = vrsqrt.pop %v1576
          %v1579 = vmul.f32 %v1501, %v1577
          %v1580 = vmul.f32 %v1502, %v1577
          %v1581 = vmul.f32 %v1503, %v1577
          %v1582 = vmul.f32 %v1504, %v1577
          %v1583 = vmul.f32 %v1505, %v1577
          %v1584 = vmul.f32 %v1506, %v1577
          %v1585 = vmul.f32 %v1507, %v1577
          %v1586 = vmul.f32 %v1508, %v1577
          %v1587 = vmul.f32 %v1509, %v1578
          %v1588 = vmul.f32 %v1510, %v1578
          %v1589 = vmul.f32 %v1511, %v1578
          %v1590 = vmul.f32 %v1512, %v1578
          %v1591 = vmul.f32 %v1513, %v1578
          %v1592 = vmul.f32 %v1514, %v1578
          %v1593 = vmul.f32 %v1515, %v1578
          %v1594 = vmul.f32 %v1516, %v1578
          %v1595 = vmul.f32 %v1421, %v1579
          %v1596 = vmul.f32 %v1422, %v1580
          %v1597 = vmul.f32 %v1423, %v1581
          %v1598 = vmul.f32 %v1424, %v1582
          %v1599 = vmul.f32 %v1425, %v1583
          %v1600 = vmul.f32 %v1426, %v1584
          %v1601 = vmul.f32 %v1427, %v1585
          %v1602 = vmul.f32 %v1428, %v1586
          %v1603 = vmul.f32 %v1429, %v1587
          %v1604 = vmul.f32 %v1430, %v1588
          %v1605 = vmul.f32 %v1431, %v1589
          %v1606 = vmul.f32 %v1432, %v1590
          %v1607 = vmul.f32 %v1433, %v1591
          %v1608 = vmul.f32 %v1434, %v1592
          %v1609 = vmul.f32 %v1435, %v1593
          %v1610 = vmul.f32 %v1436, %v1594
          %1611 = vst [vmem:[%s186] sm:$0xff] %v1595
          %1612 = vst [vmem:[%s186 + $0x8] sm:$0xff] %v1596
          %1613 = vst [vmem:[%s186 + $0x10] sm:$0xff] %v1597
          %1614 = vst [vmem:[%s186 + $0x18] sm:$0xff] %v1598
          %1615 = vst [vmem:[%s186 + $0x20] sm:$0xff] %v1599
          %1616 = vst [vmem:[%s186 + $0x28] sm:$0xff] %v1600
          %1617 = vst [vmem:[%s186 + $0x30] sm:$0xff] %v1601
          %1618 = vst [vmem:[%s186 + $0x38] sm:$0xff] %v1602
          %1619 = vst [vmem:[%s186 + $0x40] sm:$0xff] %v1603
          %1620 = vst [vmem:[%s186 + $0x48] sm:$0xff] %v1604
          %1621 = vst [vmem:[%s186 + $0x50] sm:$0xff] %v1605
          %1622 = vst [vmem:[%s186 + $0x58] sm:$0xff] %v1606
          %1623 = vst [vmem:[%s186 + $0x60] sm:$0xff] %v1607
          %1624 = vst [vmem:[%s186 + $0x68] sm:$0xff] %v1608
          %1625 = vst [vmem:[%s186 + $0x70] sm:$0xff] %v1609
          %1626 = vst [vmem:[%s186 + $0x78] sm:$0xff] %v1610
        $region40: #{tpu_custom_call.1} parent=31 // pred_fallthru
          _
        %s1627 = sand.u32 %s107, 1
        %s1628 = scalar_lea.sflag [#allocation5], %s1627
        %s1629 = sand.u32 %s107, 1
        %s1630 = smul.addr %s1629, 128
        %s1631 = scalar_lea.vmem [#allocation4], %s1630
        // Predicated region
        $region41: #{tpu_custom_call.1} parent=31 // pred_check
          %p1632 = pneg %p117
        $region42: #{tpu_custom_call.1} parent=31 // pred_check_branch
          %1634 = sbr.rel (%p1632) target = $region44
        $region43: #{tpu_custom_call.1} parent=31 // pred_region
          %s1635 = smul.u32 2, %s21
          %s1637 = ssub.s32 2048, 2048
          %1638 = vsyncadd %s1628, %s1637
          %s1639 = smul.addr %s1635, 8
          %s1640 = smul.addr %s1639, 128
          %s1641 = scalar_lea.hbm %s3, %s1640
          %s1642 = sshll.u32 %s1631, 4
          %s1643 = int_to_ptr.vmem [resolvable:$true] %s1642
          %1648 = dma.vmem_to_hbm [thread:$0]  %s1643, 2048, %s1641, %s1628, 128, 128, 8
        $region44: #{tpu_custom_call.1} parent=31 // pred_fallthru
          _
      $region32: #{tpu_custom_call.1} parent=5 // pred_fallthru
        _
      %p1649 = scmp.le.s32.totalorder 2, %s12
      // Predicated region
      $region45: #{tpu_custom_call.1} parent=5 // pred_check
        %p1650 = pneg %p1649
      $region46: #{tpu_custom_call.1} parent=5 // pred_check_branch
        %1652 = sbr.rel (%p1650) target = $region48
      $region47: #{tpu_custom_call.1} parent=5 // pred_region
        %s1653 = ssub.s32 %s12, 2
        // Predicated region
        $region49: #{tpu_custom_call.1} parent=47 // pred_check
          %p1654 = pneg %p123
        $region50: #{tpu_custom_call.1} parent=47 // pred_check_branch
          %1656 = sbr.rel (%p1654) target = $region52
        $region51: #{tpu_custom_call.1} parent=47 // pred_region
          %s1657 = sand.u32 %s108, 1
          %s1658 = scalar_lea.sflag [#allocation5], %s1657
          %s1659 = sand.u32 %s108, 1
          %s1660 = smul.addr %s1659, 128
          %s1661 = scalar_lea.vmem [#allocation4], %s1660
          %1662 = dma.done %s1658, 2048
        $region52: #{tpu_custom_call.1} parent=47 // pred_fallthru
          _
      $region48: #{tpu_custom_call.1} parent=5 // pred_fallthru
        _
    $region6: #{tpu_custom_call.1} parent=1 // loop_footer
      %s16 = sadd.s32 1, %s12
    $region7: #{tpu_custom_call.1} parent=1 // loop_footer_branch
      %11 = sbr.rel target = $region3
    $region8: #{tpu_custom_call.1} parent=1 // loop_exit
      _
    %1663 = vsyncpa [#allocation5], 1
    %s1664 = scalar_lea.sflag [#allocation5], 1
    %1665 = vsyncpa %s1664, 1

</llo_original>
